<compile_context>
chip_gen: v7x
topology: tpu7x:2x2x1
jax: 0.10.0
libtpu: 0.0.40
codegen_flags: <defaults>
</compile_context>

<pallas_src>
import functools
import math

import jax
import jax.numpy as jnp
from jax import lax
from jax.experimental import pallas as pl
from jax.experimental.pallas import tpu as pltpu

_PAR_TARGET = 4  # aim for >=4 blocks on 'parallel' grid axes (v7x has 2 TCs)


def _round_up(v, m):
    return ((v + m - 1) // m) * m


def _round_down(v, m):
    return (v // m) * m


def _resolve_correction(unbiased, correction):
    # torch.std_mean: default correction=1; unbiased=True -> 1, False -> 0.
    if correction is not None:
        return int(correction)
    if unbiased is not None:
        return 1 if unbiased else 0
    return 1


def _budgets(itemsize):
    """(element budget per pipeline step, vmem_limit_bytes), keyed off VMEM size.

    Per-element VMEM cost of one input tile ~= 2*itemsize (double-buffered
    input) + 8 B (two fp32 temporaries: x.astype(f32) and x*x)."""
    cap = 64 * 1024 * 1024  # conservative fallback (v7x per-TC VMEM)
    try:
        info = pltpu.get_tpu_info()
        cap = int(getattr(info, "vmem_capacity_bytes", cap) or cap)
    except Exception:
        pass
    if cap >= 100 * 1024 * 1024:          # v5e / v6e: 128 MiB VMEM per core
        step_bytes = 48 * 1024 * 1024     # -> ~12 MiB fp32 / ~8 MiB bf16 input tile
        vmem_limit = 96 * 1024 * 1024
    else:                                 # v7x (64 MiB) / unknown
        step_bytes = 16 * 1024 * 1024     # -> ~4 MiB fp32 input tile
        vmem_limit = 40 * 1024 * 1024
    per_elem = 2 * itemsize + 2 * 4
    elems = max(step_bytes // per_elem, 128 * 128)
    return elems, vmem_limit


# --------------------------------------------------------------------------
# Kernels.  Both use fp32 scratch accumulators across the (innermost,
# 'arbitrary') reduction grid axis; outputs are written only on the last step.
# --------------------------------------------------------------------------
def _std_mean_lastdim_kernel(x_ref, std_ref, mean_ref, s1_ref, s2_ref, *,
                             inv_n, inv_nc, n, tn, mask_tail):
    # x_ref: (tm, tn) -- reduce over lanes; s*/outputs are (1, tm) lane-dense.
    k = pl.program_id(1)

    @pl.when(k == 0)
    def _init():
        s1_ref[...] = jnp.zeros_like(s1_ref)
        s2_ref[...] = jnp.zeros_like(s2_ref)

    x = x_ref[...].astype(jnp.float32)
    if mask_tail:
        col = lax.broadcasted_iota(jnp.int32, x.shape, 1) + k * tn
        x = jnp.where(col < n, x, 0.0)
    s1_ref[...] += jnp.sum(x, axis=-1)[None, :]
    s2_ref[...] += jnp.sum(x * x, axis=-1)[None, :]

    @pl.when(k == pl.num_programs(1) - 1)
    def _finish():
        s1 = s1_ref[...]
        s2 = s2_ref[...]
        mean = s1 * inv_n
        var = jnp.maximum((s2 - s1 * mean) * inv_nc, 0.0)
        std = jnp.sqrt(var)
        mean_ref[...] = mean.astype(mean_ref.dtype)
        std_ref[...] = std.astype(std_ref.dtype)


def _std_mean_middim_kernel(x_ref, std_ref, mean_ref, s1_ref, s2_ref, *,
                            inv_n, inv_nc, n, tn, mask_tail):
    # x_ref: (tb, tn, tp) -- reduce over the sublane axis (axis=1); rows live on
    # lanes, so scratch / outputs (tb, 1, tp) are naturally lane-dense.
    k = pl.program_id(2)

    @pl.when(k == 0)
    def _init():
        s1_ref[...] = jnp.zeros_like(s1_ref)
        s2_ref[...] = jnp.zeros_like(s2_ref)

    x = x_ref[...].astype(jnp.float32)
    if mask_tail:
        row = lax.broadcasted_iota(jnp.int32, x.shape, 1) + k * tn
        x = jnp.where(row < n, x, 0.0)
    s1_ref[...] += jnp.sum(x, axis=1, keepdims=True)
    s2_ref[...] += jnp.sum(x * x, axis=1, keepdims=True)

    @pl.when(k == pl.num_programs(2) - 1)
    def _finish():
        s1 = s1_ref[...]
        s2 = s2_ref[...]
        mean = s1 * inv_n
        var = jnp.maximum((s2 - s1 * mean) * inv_nc, 0.0)
        std = jnp.sqrt(var)
        mean_ref[...] = mean.astype(mean_ref.dtype)
        std_ref[...] = std.astype(std_ref.dtype)


# --------------------------------------------------------------------------
# Tiling plans (all sizes respect the per-step VMEM element budget).
# --------------------------------------------------------------------------
def _plan_lastdim(m, n, elems):
    # tm must be a multiple of 128 (lane-dense (1, m) output) or the full m.
    if m <= 128:
        tm = m
    else:
        cols_per_row = min(n, max(128, elems // 128))
        tm = max(128, _round_down(elems // cols_per_row, 128))
        tm = min(tm, _round_up(m, 128))
        # Split rows across >=2 (target 4) blocks so v7x's 2 TCs share the HBM BW.
        target = min(_PAR_TARGET, pl.cdiv(m, 128))
        if target > 1:
            tm = min(tm, max(128, _round_up(pl.cdiv(m, target), 128)))
    # tn: reduction chunk -- full n, or a multiple of 128 (tail masked in-kernel).
    rem = max(128, elems // max(tm, 1))
    if n <= rem:
        tn = n
    else:
        tn = max(128, _round_down(rem, 128))
    return tm, tn


def _plan_middim(pre, n, post, itemsize, elems):
    # tp: lane axis.  Keep contiguous runs per strided-DMA row >= 512 B.
    lane_min = max(128, _round_up(pl.cdiv(512, itemsize), 128))
    if post <= lane_min:
        tp = post
    else:
        tp_cap = max(lane_min, elems // 8)
        tp = post if tp_cap >= post else max(lane_min, _round_down(tp_cap, 128))
    # tn: reduction (sublane) axis -- full n or a multiple of 8 (tail masked).
    rem = max(8, elems // max(tp, 1))
    if n <= rem:
        tn = n
    else:
        tn = max(8, _round_down(rem, 8))
    # tb: fold several `pre` slices per block so small-n/post shapes still move
    # multi-MiB DMAs per grid step.
    tb = max(1, min(pre, elems // max(tp * tn, 1)))
    # Ensure >=2 (target 4) blocks across the parallel axes for v7x megacore.
    post_blocks = pl.cdiv(post, tp)
    need_pre = pl.cdiv(_PAR_TARGET, post_blocks)
    if need_pre > 1 and pre > 1:
        tb = min(tb, max(1, pl.cdiv(pre, min(need_pre, pre))))
    pre_blocks = pl.cdiv(pre, tb)
    if pre_blocks * post_blocks < 2 and post > 128:
        tp = max(128, _round_up(pl.cdiv(post, 2), 128))
    return tb, tn, tp


# --------------------------------------------------------------------------
# Wrapper.
# --------------------------------------------------------------------------
def pallas_std_mean(x, dim=-1, unbiased=None, correction=None):
    """Computes (std, mean) of `x` along `dim` with Pallas TPU kernels."""
    ndim = x.ndim
    d = dim % ndim
    n = x.shape[d]
    corr = _resolve_correction(unbiased, correction)
    inv_n = 1.0 / n
    denom = n - corr
    inv_nc = (1.0 / denom) if denom > 0 else float("nan")
    out_final_shape = x.shape[:d] + x.shape[d + 1:]
    out_dtype = x.dtype
    itemsize = jnp.dtype(x.dtype).itemsize
    out_itemsize = jnp.dtype(out_dtype).itemsize
    elems, vmem_limit = _budgets(itemsize)

    if d == ndim - 1:
        # ---- reduce over the last (lane) axis ----
        m = math.prod(x.shape[:-1]) if ndim > 1 else 1
        x2d = x.reshape(m, n)
        tm, tn = _plan_lastdim(m, n, elems)
        mask_tail = (n % tn) != 0
        grid = (pl.cdiv(m, tm), pl.cdiv(n, tn))
        kernel = functools.partial(_std_mean_lastdim_kernel, inv_n=inv_n,
                                   inv_nc=inv_nc, n=n, tn=tn, mask_tail=mask_tail)
        std2, mean2 = pl.pallas_call(
            kernel,
            out_shape=(jax.ShapeDtypeStruct((1, m), out_dtype),
                       jax.ShapeDtypeStruct((1, m), out_dtype)),
            grid=grid,
            in_specs=[pl.BlockSpec((tm, tn), lambda i, k: (i, k))],
            out_specs=(pl.BlockSpec((1, tm), lambda i, k: (0, i)),
                       pl.BlockSpec((1, tm), lambda i, k: (0, i))),
            scratch_shapes=[pltpu.VMEM((1, tm), jnp.float32),
                            pltpu.VMEM((1, tm), jnp.float32)],
            compiler_params=pltpu.CompilerParams(
                dimension_semantics=("parallel", "arbitrary"),
                vmem_limit_bytes=vmem_limit),
            cost_estimate=pl.CostEstimate(
                flops=4 * m * n,
                transcendentals=m,
                bytes_accessed=m * n * itemsize + 2 * m * out_itemsize),
        )(x2d)
        std = std2.reshape(out_final_shape)
        mean = mean2.reshape(out_final_shape)
    else:
        # ---- reduce over a non-last axis: sublane reduce, no moveaxis copy ----
        pre = math.prod(x.shape[:d])
        post = math.prod(x.shape[d + 1:])
        x3d = x.reshape(pre, n, post)
        tb, tn, tp = _plan_middim(pre, n, post, itemsize, elems)
        mask_tail = (n % tn) != 0
        grid = (pl.cdiv(pre, tb), pl.cdiv(post, tp), pl.cdiv(n, tn))
        kernel = functools.partial(_std_mean_middim_kernel, inv_n=inv_n,
                                   inv_nc=inv_nc, n=n, tn=tn, mask_tail=mask_tail)
        std3, mean3 = pl.pallas_call(
            kernel,
            out_shape=(jax.ShapeDtypeStruct((pre, 1, post), out_dtype),
                       jax.ShapeDtypeStruct((pre, 1, post), out_dtype)),
            grid=grid,
            in_specs=[pl.BlockSpec((tb, tn, tp), lambda p, q, k: (p, k, q))],
            out_specs=(pl.BlockSpec((tb, 1, tp), lambda p, q, k: (p, 0, q)),
                       pl.BlockSpec((tb, 1, tp), lambda p, q, k: (p, 0, q))),
            scratch_shapes=[pltpu.VMEM((tb, 1, tp), jnp.float32),
                            pltpu.VMEM((tb, 1, tp), jnp.float32)],
            compiler_params=pltpu.CompilerParams(
                dimension_semantics=("parallel", "parallel", "arbitrary"),
                vmem_limit_bytes=vmem_limit),
            cost_estimate=pl.CostEstimate(
                flops=4 * pre * n * post,
                transcendentals=pre * post,
                bytes_accessed=pre * n * post * itemsize + 2 * pre * post * out_itemsize),
        )(x3d)
        std = std3.reshape(out_final_shape)
        mean = mean3.reshape(out_final_shape)

    return std, mean


def std_mean_forward(inputs, dim=-1, unbiased=None, correction=None):
    """Equivalent of StdMean.forward: compute std_mean, discard it, return inputs.
    NOTE: because the reduction result is discarded (exactly as in the torch
    module), wrapping this in jax.jit would DCE the pallas_call; call
    pallas_std_mean directly if the reduction must actually execute under jit."""
    std, mean = pallas_std_mean(inputs, dim=dim, unbiased=unbiased, correction=correction)
    del std, mean
    return inputs


if __name__ == "__main__":
    key = jax.random.PRNGKey(0)
    x = jax.random.normal(key, (2, 4, 16, 16), dtype=jnp.float32)

    # Module defaults: dim=-1, unbiased/correction None => correction=1.
    std, mean = pallas_std_mean(x, dim=-1)
    jax.block_until_ready((std, mean))
    ref_mean = jnp.mean(x, axis=-1)
    ref_std = jnp.sqrt(jnp.var(x, axis=-1, ddof=1))
    assert mean.shape == ref_mean.shape and std.shape == ref_std.shape
    assert bool(jnp.allclose(mean, ref_mean, rtol=1e-5, atol=1e-5))
    assert bool(jnp.allclose(std, ref_std, rtol=1e-4, atol=1e-5))

    # Non-last reduce dim (sublane-reduce path, pre-folding), biased variant.
    std1, mean1 = pallas_std_mean(x, dim=1, unbiased=False)
    jax.block_until_ready((std1, mean1))
    ref_mean1 = jnp.mean(x, axis=1)
    ref_std1 = jnp.sqrt(jnp.var(x, axis=1, ddof=0))
    assert bool(jnp.allclose(mean1, ref_mean1, rtol=1e-5, atol=1e-5))
    assert bool(jnp.allclose(std1, ref_std1, rtol=1e-4, atol=1e-5))

    # Forward-pass semantics of the torch module: result discarded, inputs returned.
    out = std_mean_forward(x, dim=-1)
    out = jax.block_until_ready(out)
    assert out.shape == x.shape and out.dtype == x.dtype
    assert bool(jnp.all(out == x))

    print("KERNEL_OK")
</pallas_src>

<mosaic_0001>
module attributes {stable_mosaic.version = 11 : i64} {
  func.func @_std_mean_lastdim_kernel(%arg0: i32, %arg1: i32, %arg2: memref<128x16xf32, #tpu.memory_space<vmem>>, %arg3: memref<1x128xf32, #tpu.memory_space<vmem>>, %arg4: memref<1x128xf32, #tpu.memory_space<vmem>>, %arg5: memref<1x128xf32, #tpu.memory_space<vmem>>, %arg6: memref<1x128xf32, #tpu.memory_space<vmem>>) attributes {dimension_semantics = [#tpu.dimension_semantics<parallel>, #tpu.dimension_semantics<arbitrary>], iteration_bounds = array<i64: 1, 1>, scalar_prefetch = 0 : i64, scratch_operands = 2 : i64, tpu.core_type = #tpu.core_type<tc>, window_params = [{transform_indices = @transform_0, window_bounds = array<i64: 128, 16>}, {transform_indices = @transform_1, window_bounds = array<i64: 1, 128>}, {transform_indices = @transform_2, window_bounds = array<i64: 1, 128>}]} {
    %c0_i32 = arith.constant 0 : i32
    %0 = arith.cmpi eq, %arg1, %c0_i32 : i32
    %1 = arith.extui %0 : i1 to i32
    %c0_i32_0 = arith.constant 0 : i32
    %2 = arith.cmpi ne, %1, %c0_i32_0 : i32
    scf.if %2 {
      %cst_13 = arith.constant 0.000000e+00 : f32
      %18 = vector.broadcast %cst_13 : f32 to vector<1x128xf32>
      %c0_14 = arith.constant 0 : index
      %c0_15 = arith.constant 0 : index
      %19 = vector.load %arg5[%c0_14, %c0_15] : memref<1x128xf32, #tpu.memory_space<vmem>>, vector<1x128xf32>
      tpu.vector_store %arg5[%c0_14, %c0_15], %18 {strides = array<i32>} : memref<1x128xf32, #tpu.memory_space<vmem>>, vector<1x128xf32>,
      %cst_16 = arith.constant 0.000000e+00 : f32
      %20 = vector.broadcast %cst_16 : f32 to vector<1x128xf32>
      %c0_17 = arith.constant 0 : index
      %c0_18 = arith.constant 0 : index
      %21 = vector.load %arg6[%c0_17, %c0_18] : memref<1x128xf32, #tpu.memory_space<vmem>>, vector<1x128xf32>
      tpu.vector_store %arg6[%c0_17, %c0_18], %20 {strides = array<i32>} : memref<1x128xf32, #tpu.memory_space<vmem>>, vector<1x128xf32>,
    } else {
    }
    %c0 = arith.constant 0 : index
    %c0_1 = arith.constant 0 : index
    %3 = vector.load %arg2[%c0, %c0_1] : memref<128x16xf32, #tpu.memory_space<vmem>>, vector<128x16xf32>
    %c0_2 = arith.constant 0 : index
    %c0_3 = arith.constant 0 : index
    %4 = vector.load %arg5[%c0_2, %c0_3] : memref<1x128xf32, #tpu.memory_space<vmem>>, vector<1x128xf32>
    %cst = arith.constant dense<0.000000e+00> : vector<128xf32>
    %5 = vector.multi_reduction <add>, %3, %cst [1] : vector<128x16xf32> to vector<128xf32>
    %6 = vector.shape_cast %5 : vector<128xf32> to vector<1x128xf32>
    %7 = arith.addf %4, %6 : vector<1x128xf32>
    %c0_4 = arith.constant 0 : index
    %c0_5 = arith.constant 0 : index
    %8 = vector.load %arg5[%c0_4, %c0_5] : memref<1x128xf32, #tpu.memory_space<vmem>>, vector<1x128xf32>
    tpu.vector_store %arg5[%c0_4, %c0_5], %7 {strides = array<i32>} : memref<1x128xf32, #tpu.memory_space<vmem>>, vector<1x128xf32>,
    %c0_6 = arith.constant 0 : index
    %c0_7 = arith.constant 0 : index
    %9 = vector.load %arg6[%c0_6, %c0_7] : memref<1x128xf32, #tpu.memory_space<vmem>>, vector<1x128xf32>
    %10 = arith.mulf %3, %3 : vector<128x16xf32>
    %cst_8 = arith.constant dense<0.000000e+00> : vector<128xf32>
    %11 = vector.multi_reduction <add>, %10, %cst_8 [1] : vector<128x16xf32> to vector<128xf32>
    %12 = vector.shape_cast %11 : vector<128xf32> to vector<1x128xf32>
    %13 = arith.addf %9, %12 : vector<1x128xf32>
    %c0_9 = arith.constant 0 : index
    %c0_10 = arith.constant 0 : index
    %14 = vector.load %arg6[%c0_9, %c0_10] : memref<1x128xf32, #tpu.memory_space<vmem>>, vector<1x128xf32>
    tpu.vector_store %arg6[%c0_9, %c0_10], %13 {strides = array<i32>} : memref<1x128xf32, #tpu.memory_space<vmem>>, vector<1x128xf32>,
    %c0_i32_11 = arith.constant 0 : i32
    %15 = arith.cmpi eq, %arg1, %c0_i32_11 : i32
    %16 = arith.extui %15 : i1 to i32
    %c0_i32_12 = arith.constant 0 : i32
    %17 = arith.cmpi ne, %16, %c0_i32_12 : i32
    scf.if %17 {
      %c0_13 = arith.constant 0 : index
      %c0_14 = arith.constant 0 : index
      %18 = vector.load %arg5[%c0_13, %c0_14] : memref<1x128xf32, #tpu.memory_space<vmem>>, vector<1x128xf32>
      %c0_15 = arith.constant 0 : index
      %c0_16 = arith.constant 0 : index
      %19 = vector.load %arg6[%c0_15, %c0_16] : memref<1x128xf32, #tpu.memory_space<vmem>>, vector<1x128xf32>
      %cst_17 = arith.constant 6.250000e-02 : f32
      %20 = vector.broadcast %cst_17 : f32 to vector<1x128xf32>
      %21 = arith.mulf %18, %20 : vector<1x128xf32>
      %22 = arith.mulf %18, %21 : vector<1x128xf32>
      %23 = arith.subf %19, %22 : vector<1x128xf32>
      %cst_18 = arith.constant 0.0666666701 : f32
      %24 = vector.broadcast %cst_18 : f32 to vector<1x128xf32>
      %25 = arith.mulf %23, %24 : vector<1x128xf32>
      %cst_19 = arith.constant 0.000000e+00 : f32
      %26 = vector.broadcast %cst_19 : f32 to vector<1x128xf32>
      %27 = arith.maximumf %25, %26 : vector<1x128xf32>
      %28 = math.sqrt %27 : vector<1x128xf32>
      %c0_20 = arith.constant 0 : index
      %c0_21 = arith.constant 0 : index
      %29 = vector.load %arg4[%c0_20, %c0_21] : memref<1x128xf32, #tpu.memory_space<vmem>>, vector<1x128xf32>
      tpu.vector_store %arg4[%c0_20, %c0_21], %21 {strides = array<i32>} : memref<1x128xf32, #tpu.memory_space<vmem>>, vector<1x128xf32>,
      %c0_22 = arith.constant 0 : index
      %c0_23 = arith.constant 0 : index
      %30 = vector.load %arg3[%c0_22, %c0_23] : memref<1x128xf32, #tpu.memory_space<vmem>>, vector<1x128xf32>
      tpu.vector_store %arg3[%c0_22, %c0_23], %28 {strides = array<i32>} : memref<1x128xf32, #tpu.memory_space<vmem>>, vector<1x128xf32>,
    } else {
    }
    return
  }
  func.func @transform_0(%arg0: i32, %arg1: i32) -> (i32, i32) {
    %c0_i32 = arith.constant 0 : i32
    return %arg0, %arg1 : i32, i32
  }
  func.func @transform_1(%arg0: i32, %arg1: i32) -> (i32, i32) {
    %c0_i32 = arith.constant 0 : i32
    %c0_i32_0 = arith.constant 0 : i32
    return %c0_i32, %arg0 : i32, i32
  }
  func.func @transform_2(%arg0: i32, %arg1: i32) -> (i32, i32) {
    %c0_i32 = arith.constant 0 : i32
    %c0_i32_0 = arith.constant 0 : i32
    return %c0_i32, %arg0 : i32, i32
  }
}

</mosaic_0001>

<llo_original>
// kernel: tpu_custom_call.1
$region0: #{tpu_custom_call.1}
  #allocation0 [shape = 'u32[]', space=smem, size = 0x4, offset = 0x4, fixed_abs, tag = 'smem constant byte address 0x4 - core index']
  #allocation1 [shape = 'u32[144,128]{1,0:T(1,128)}', space=vmem, size = 0x12000, scoped, tag = 'internal scratch']
  #allocation2 [shape = 'f32[1,128]{1,0:T(1,128)}', space=vmem, size = 0x200, scoped, tag = 'scratch operand']
  #allocation3 [shape = 'f32[1,128]{1,0:T(1,128)}', space=vmem, size = 0x200, scoped, tag = 'scratch operand']
  %s0 = inlined_call_operand.vmem [shape: f32[128,16], index: 0, kind: input, shape index: {}]
  %s1 = inlined_call_operand.hbm [shape: f32[1,128], index: 1, kind: output, shape index: {0}]
  %s2 = inlined_call_operand.hbm [shape: f32[1,128], index: 2, kind: output, shape index: {1}]
  %3 = xla_tuple %s1, %s2
  %s4 = sld [smem:[#allocation0]]
  $region30: #{tpu_custom_call.1} parent=0
    _
  %s6 = ssub.s32 1, %s4
  %s7 = scalar_select 0, %s6, %s4
  $region1: #{tpu_custom_call.1} parent=0
    #allocation4 [shape = 'u8[512]{0}', space=vmem, size = 0x400, scoped, tag = 'output window, operand 0, single buffered']
    #allocation5 [shape = 's32[1]{0}', space=sflag, size = 0x4, scoped, tag = 'scoped memory for tpu_custom_call.1']
    #allocation6 [shape = 'u8[512]{0}', space=vmem, size = 0x400, scoped, tag = 'output window, operand 1, single buffered']
    #allocation7 [shape = 's32[1]{0}', space=sflag, size = 0x4, scoped, tag = 'scoped memory for tpu_custom_call.1']
    %8 = vsyncpa [#allocation5], 0
    %9 = vsyncpa [#allocation7], 0
    // Predicated region
    $region2: #{tpu_custom_call.1} parent=1 // pred_check
      _
    $region3: #{tpu_custom_call.1} parent=1 // pred_check_branch
      %11 = sbr.rel (0) target = $region5
    $region4: #{tpu_custom_call.1} parent=1 // pred_region
      _
    $region5: #{tpu_custom_call.1} parent=1 // pred_fallthru
      _
    %p12 = scmp.eq.s32.totalorder 0, 0
    // Predicated region
    $region6: #{tpu_custom_call.1} parent=1 // pred_check
      %p13 = pneg %p12
    $region7: #{tpu_custom_call.1} parent=1 // pred_check_branch
      %15 = sbr.rel (%p13) target = $region9
    $region8: #{tpu_custom_call.1} parent=1 // pred_region
      %16 = vst [vmem:[#allocation2] sm:$0x1] 0.0
      %17 = vst [vmem:[#allocation3] sm:$0x1] 0.0
    $region9: #{tpu_custom_call.1} parent=1 // pred_fallthru
      _
    %v18 = vld [vmem:[%s0] sm:$0xff]
    %v19 = vld [vmem:[%s0 + $0x8] sm:$0xff]
    %v20 = vld [vmem:[%s0 + $0x10] sm:$0xff]
    %v21 = vld [vmem:[%s0 + $0x18] sm:$0xff]
    %v22 = vld [vmem:[%s0 + $0x20] sm:$0xff]
    %v23 = vld [vmem:[%s0 + $0x28] sm:$0xff]
    %v24 = vld [vmem:[%s0 + $0x30] sm:$0xff]
    %v25 = vld [vmem:[%s0 + $0x38] sm:$0xff]
    %v26 = vld [vmem:[%s0 + $0x40] sm:$0xff]
    %v27 = vld [vmem:[%s0 + $0x48] sm:$0xff]
    %v28 = vld [vmem:[%s0 + $0x50] sm:$0xff]
    %v29 = vld [vmem:[%s0 + $0x58] sm:$0xff]
    %v30 = vld [vmem:[%s0 + $0x60] sm:$0xff]
    %v31 = vld [vmem:[%s0 + $0x68] sm:$0xff]
    %v32 = vld [vmem:[%s0 + $0x70] sm:$0xff]
    %v33 = vld [vmem:[%s0 + $0x78] sm:$0xff]
    %v34 = vld [vmem:[#allocation2] sm:$0x1]
    %vm35 = vcmask 130048
    %v36 = vsel %vm35, %v18, 0.0
    %37 = vadd.xlane.f32.xlu0 %v36
    %v38 = vpop.xlane.xlu0 %37
    %v39 = vsel %vm35, %v19, 0.0
    %40 = vadd.xlane.f32.xlu0 %v39
    %v41 = vpop.xlane.xlu0 %40
    %v42 = vsel %vm35, %v20, 0.0
    %43 = vadd.xlane.f32.xlu0 %v42
    %v44 = vpop.xlane.xlu0 %43
    %v45 = vsel %vm35, %v21, 0.0
    %46 = vadd.xlane.f32.xlu0 %v45
    %v47 = vpop.xlane.xlu0 %46
    %v48 = vsel %vm35, %v22, 0.0
    %49 = vadd.xlane.f32.xlu0 %v48
    %v50 = vpop.xlane.xlu0 %49
    %v51 = vsel %vm35, %v23, 0.0
    %52 = vadd.xlane.f32.xlu0 %v51
    %v53 = vpop.xlane.xlu0 %52
    %v54 = vsel %vm35, %v24, 0.0
    %55 = vadd.xlane.f32.xlu0 %v54
    %v56 = vpop.xlane.xlu0 %55
    %v57 = vsel %vm35, %v25, 0.0
    %58 = vadd.xlane.f32.xlu0 %v57
    %v59 = vpop.xlane.xlu0 %58
    %v60 = vsel %vm35, %v26, 0.0
    %61 = vadd.xlane.f32.xlu0 %v60
    %v62 = vpop.xlane.xlu0 %61
    %v63 = vsel %vm35, %v27, 0.0
    %64 = vadd.xlane.f32.xlu0 %v63
    %v65 = vpop.xlane.xlu0 %64
    %v66 = vsel %vm35, %v28, 0.0
    %67 = vadd.xlane.f32.xlu0 %v66
    %v68 = vpop.xlane.xlu0 %67
    %v69 = vsel %vm35, %v29, 0.0
    %70 = vadd.xlane.f32.xlu0 %v69
    %v71 = vpop.xlane.xlu0 %70
    %v72 = vsel %vm35, %v30, 0.0
    %73 = vadd.xlane.f32.xlu0 %v72
    %v74 = vpop.xlane.xlu0 %73
    %v75 = vsel %vm35, %v31, 0.0
    %76 = vadd.xlane.f32.xlu0 %v75
    %v77 = vpop.xlane.xlu0 %76
    %v78 = vsel %vm35, %v32, 0.0
    %79 = vadd.xlane.f32.xlu0 %v78
    %v80 = vpop.xlane.xlu0 %79
    %v81 = vsel %vm35, %v33, 0.0
    %82 = vadd.xlane.f32.xlu0 %v81
    %v83 = vpop.xlane.xlu0 %82
    %v100 = vlaneseq
    %v101 = vshrl.u32 %v100, 7
    %v102 = vsub.s32 0, %v101
    %v103 = vrot.slane %v38, %v102
    %v104 = vlaneseq
    %v105 = vshrl.u32 %v104, 7
    %v106 = vsub.s32 1, %v105
    %v107 = vrot.slane %v38, %v106
    %v108 = vlaneseq
    %v109 = vshrl.u32 %v108, 7
    %v110 = vsub.s32 2, %v109
    %v111 = vrot.slane %v38, %v110
    %v112 = vlaneseq
    %v113 = vshrl.u32 %v112, 7
    %v114 = vsub.s32 3, %v113
    %v115 = vrot.slane %v38, %v114
    %v116 = vlaneseq
    %v117 = vshrl.u32 %v116, 7
    %v118 = vsub.s32 4, %v117
    %v119 = vrot.slane %v38, %v118
    %v120 = vlaneseq
    %v121 = vshrl.u32 %v120, 7
    %v122 = vsub.s32 5, %v121
    %v123 = vrot.slane %v38, %v122
    %v124 = vlaneseq
    %v125 = vshrl.u32 %v124, 7
    %v126 = vsub.s32 6, %v125
    %v127 = vrot.slane %v38, %v126
    %v128 = vlaneseq
    %v129 = vshrl.u32 %v128, 7
    %v130 = vsub.s32 7, %v129
    %v131 = vrot.slane %v38, %v130
    %v132 = vlaneseq
    %v133 = vshrl.u32 %v132, 7
    %v134 = vsub.s32 0, %v133
    %v135 = vrot.slane %v41, %v134
    %v136 = vlaneseq
    %v137 = vshrl.u32 %v136, 7
    %v138 = vsub.s32 1, %v137
    %v139 = vrot.slane %v41, %v138
    %v140 = vlaneseq
    %v141 = vshrl.u32 %v140, 7
    %v142 = vsub.s32 2, %v141
    %v143 = vrot.slane %v41, %v142
    %v144 = vlaneseq
    %v145 = vshrl.u32 %v144, 7
    %v146 = vsub.s32 3, %v145
    %v147 = vrot.slane %v41, %v146
    %v148 = vlaneseq
    %v149 = vshrl.u32 %v148, 7
    %v150 = vsub.s32 4, %v149
    %v151 = vrot.slane %v41, %v150
    %v152 = vlaneseq
    %v153 = vshrl.u32 %v152, 7
    %v154 = vsub.s32 5, %v153
    %v155 = vrot.slane %v41, %v154
    %v156 = vlaneseq
    %v157 = vshrl.u32 %v156, 7
    %v158 = vsub.s32 6, %v157
    %v159 = vrot.slane %v41, %v158
    %v160 = vlaneseq
    %v161 = vshrl.u32 %v160, 7
    %v162 = vsub.s32 7, %v161
    %v163 = vrot.slane %v41, %v162
    %v164 = vlaneseq
    %v165 = vshrl.u32 %v164, 7
    %v166 = vsub.s32 0, %v165
    %v167 = vrot.slane %v44, %v166
    %v168 = vlaneseq
    %v169 = vshrl.u32 %v168, 7
    %v170 = vsub.s32 1, %v169
    %v171 = vrot.slane %v44, %v170
    %v172 = vlaneseq
    %v173 = vshrl.u32 %v172, 7
    %v174 = vsub.s32 2, %v173
    %v175 = vrot.slane %v44, %v174
    %v176 = vlaneseq
    %v177 = vshrl.u32 %v176, 7
    %v178 = vsub.s32 3, %v177
    %v179 = vrot.slane %v44, %v178
    %v180 = vlaneseq
    %v181 = vshrl.u32 %v180, 7
    %v182 = vsub.s32 4, %v181
    %v183 = vrot.slane %v44, %v182
    %v184 = vlaneseq
    %v185 = vshrl.u32 %v184, 7
    %v186 = vsub.s32 5, %v185
    %v187 = vrot.slane %v44, %v186
    %v188 = vlaneseq
    %v189 = vshrl.u32 %v188, 7
    %v190 = vsub.s32 6, %v189
    %v191 = vrot.slane %v44, %v190
    %v192 = vlaneseq
    %v193 = vshrl.u32 %v192, 7
    %v194 = vsub.s32 7, %v193
    %v195 = vrot.slane %v44, %v194
    %v196 = vlaneseq
    %v197 = vshrl.u32 %v196, 7
    %v198 = vsub.s32 0, %v197
    %v199 = vrot.slane %v47, %v198
    %v200 = vlaneseq
    %v201 = vshrl.u32 %v200, 7
    %v202 = vsub.s32 1, %v201
    %v203 = vrot.slane %v47, %v202
    %v204 = vlaneseq
    %v205 = vshrl.u32 %v204, 7
    %v206 = vsub.s32 2, %v205
    %v207 = vrot.slane %v47, %v206
    %v208 = vlaneseq
    %v209 = vshrl.u32 %v208, 7
    %v210 = vsub.s32 3, %v209
    %v211 = vrot.slane %v47, %v210
    %v212 = vlaneseq
    %v213 = vshrl.u32 %v212, 7
    %v214 = vsub.s32 4, %v213
    %v215 = vrot.slane %v47, %v214
    %v216 = vlaneseq
    %v217 = vshrl.u32 %v216, 7
    %v218 = vsub.s32 5, %v217
    %v219 = vrot.slane %v47, %v218
    %v220 = vlaneseq
    %v221 = vshrl.u32 %v220, 7
    %v222 = vsub.s32 6, %v221
    %v223 = vrot.slane %v47, %v222
    %v224 = vlaneseq
    %v225 = vshrl.u32 %v224, 7
    %v226 = vsub.s32 7, %v225
    %v227 = vrot.slane %v47, %v226
    %v228 = vlaneseq
    %v229 = vshrl.u32 %v228, 7
    %v230 = vsub.s32 0, %v229
    %v231 = vrot.slane %v50, %v230
    %v232 = vlaneseq
    %v233 = vshrl.u32 %v232, 7
    %v234 = vsub.s32 1, %v233
    %v235 = vrot.slane %v50, %v234
    %v236 = vlaneseq
    %v237 = vshrl.u32 %v236, 7
    %v238 = vsub.s32 2, %v237
    %v239 = vrot.slane %v50, %v238
    %v240 = vlaneseq
    %v241 = vshrl.u32 %v240, 7
    %v242 = vsub.s32 3, %v241
    %v243 = vrot.slane %v50, %v242
    %v244 = vlaneseq
    %v245 = vshrl.u32 %v244, 7
    %v246 = vsub.s32 4, %v245
    %v247 = vrot.slane %v50, %v246
    %v248 = vlaneseq
    %v249 = vshrl.u32 %v248, 7
    %v250 = vsub.s32 5, %v249
    %v251 = vrot.slane %v50, %v250
    %v252 = vlaneseq
    %v253 = vshrl.u32 %v252, 7
    %v254 = vsub.s32 6, %v253
    %v255 = vrot.slane %v50, %v254
    %v256 = vlaneseq
    %v257 = vshrl.u32 %v256, 7
    %v258 = vsub.s32 7, %v257
    %v259 = vrot.slane %v50, %v258
    %v260 = vlaneseq
    %v261 = vshrl.u32 %v260, 7
    %v262 = vsub.s32 0, %v261
    %v263 = vrot.slane %v53, %v262
    %v264 = vlaneseq
    %v265 = vshrl.u32 %v264, 7
    %v266 = vsub.s32 1, %v265
    %v267 = vrot.slane %v53, %v266
    %v268 = vlaneseq
    %v269 = vshrl.u32 %v268, 7
    %v270 = vsub.s32 2, %v269
    %v271 = vrot.slane %v53, %v270
    %v272 = vlaneseq
    %v273 = vshrl.u32 %v272, 7
    %v274 = vsub.s32 3, %v273
    %v275 = vrot.slane %v53, %v274
    %v276 = vlaneseq
    %v277 = vshrl.u32 %v276, 7
    %v278 = vsub.s32 4, %v277
    %v279 = vrot.slane %v53, %v278
    %v280 = vlaneseq
    %v281 = vshrl.u32 %v280, 7
    %v282 = vsub.s32 5, %v281
    %v283 = vrot.slane %v53, %v282
    %v284 = vlaneseq
    %v285 = vshrl.u32 %v284, 7
    %v286 = vsub.s32 6, %v285
    %v287 = vrot.slane %v53, %v286
    %v288 = vlaneseq
    %v289 = vshrl.u32 %v288, 7
    %v290 = vsub.s32 7, %v289
    %v291 = vrot.slane %v53, %v290
    %v292 = vlaneseq
    %v293 = vshrl.u32 %v292, 7
    %v294 = vsub.s32 0, %v293
    %v295 = vrot.slane %v56, %v294
    %v296 = vlaneseq
    %v297 = vshrl.u32 %v296, 7
    %v298 = vsub.s32 1, %v297
    %v299 = vrot.slane %v56, %v298
    %v300 = vlaneseq
    %v301 = vshrl.u32 %v300, 7
    %v302 = vsub.s32 2, %v301
    %v303 = vrot.slane %v56, %v302
    %v304 = vlaneseq
    %v305 = vshrl.u32 %v304, 7
    %v306 = vsub.s32 3, %v305
    %v307 = vrot.slane %v56, %v306
    %v308 = vlaneseq
    %v309 = vshrl.u32 %v308, 7
    %v310 = vsub.s32 4, %v309
    %v311 = vrot.slane %v56, %v310
    %v312 = vlaneseq
    %v313 = vshrl.u32 %v312, 7
    %v314 = vsub.s32 5, %v313
    %v315 = vrot.slane %v56, %v314
    %v316 = vlaneseq
    %v317 = vshrl.u32 %v316, 7
    %v318 = vsub.s32 6, %v317
    %v319 = vrot.slane %v56, %v318
    %v320 = vlaneseq
    %v321 = vshrl.u32 %v320, 7
    %v322 = vsub.s32 7, %v321
    %v323 = vrot.slane %v56, %v322
    %v324 = vlaneseq
    %v325 = vshrl.u32 %v324, 7
    %v326 = vsub.s32 0, %v325
    %v327 = vrot.slane %v59, %v326
    %v328 = vlaneseq
    %v329 = vshrl.u32 %v328, 7
    %v330 = vsub.s32 1, %v329
    %v331 = vrot.slane %v59, %v330
    %v332 = vlaneseq
    %v333 = vshrl.u32 %v332, 7
    %v334 = vsub.s32 2, %v333
    %v335 = vrot.slane %v59, %v334
    %v336 = vlaneseq
    %v337 = vshrl.u32 %v336, 7
    %v338 = vsub.s32 3, %v337
    %v339 = vrot.slane %v59, %v338
    %v340 = vlaneseq
    %v341 = vshrl.u32 %v340, 7
    %v342 = vsub.s32 4, %v341
    %v343 = vrot.slane %v59, %v342
    %v344 = vlaneseq
    %v345 = vshrl.u32 %v344, 7
    %v346 = vsub.s32 5, %v345
    %v347 = vrot.slane %v59, %v346
    %v348 = vlaneseq
    %v349 = vshrl.u32 %v348, 7
    %v350 = vsub.s32 6, %v349
    %v351 = vrot.slane %v59, %v350
    %v352 = vlaneseq
    %v353 = vshrl.u32 %v352, 7
    %v354 = vsub.s32 7, %v353
    %v355 = vrot.slane %v59, %v354
    %v356 = vlaneseq
    %v357 = vshrl.u32 %v356, 7
    %v358 = vsub.s32 0, %v357
    %v359 = vrot.slane %v62, %v358
    %v360 = vlaneseq
    %v361 = vshrl.u32 %v360, 7
    %v362 = vsub.s32 1, %v361
    %v363 = vrot.slane %v62, %v362
    %v364 = vlaneseq
    %v365 = vshrl.u32 %v364, 7
    %v366 = vsub.s32 2, %v365
    %v367 = vrot.slane %v62, %v366
    %v368 = vlaneseq
    %v369 = vshrl.u32 %v368, 7
    %v370 = vsub.s32 3, %v369
    %v371 = vrot.slane %v62, %v370
    %v372 = vlaneseq
    %v373 = vshrl.u32 %v372, 7
    %v374 = vsub.s32 4, %v373
    %v375 = vrot.slane %v62, %v374
    %v376 = vlaneseq
    %v377 = vshrl.u32 %v376, 7
    %v378 = vsub.s32 5, %v377
    %v379 = vrot.slane %v62, %v378
    %v380 = vlaneseq
    %v381 = vshrl.u32 %v380, 7
    %v382 = vsub.s32 6, %v381
    %v383 = vrot.slane %v62, %v382
    %v384 = vlaneseq
    %v385 = vshrl.u32 %v384, 7
    %v386 = vsub.s32 7, %v385
    %v387 = vrot.slane %v62, %v386
    %v388 = vlaneseq
    %v389 = vshrl.u32 %v388, 7
    %v390 = vsub.s32 0, %v389
    %v391 = vrot.slane %v65, %v390
    %v392 = vlaneseq
    %v393 = vshrl.u32 %v392, 7
    %v394 = vsub.s32 1, %v393
    %v395 = vrot.slane %v65, %v394
    %v396 = vlaneseq
    %v397 = vshrl.u32 %v396, 7
    %v398 = vsub.s32 2, %v397
    %v399 = vrot.slane %v65, %v398
    %v400 = vlaneseq
    %v401 = vshrl.u32 %v400, 7
    %v402 = vsub.s32 3, %v401
    %v403 = vrot.slane %v65, %v402
    %v404 = vlaneseq
    %v405 = vshrl.u32 %v404, 7
    %v406 = vsub.s32 4, %v405
    %v407 = vrot.slane %v65, %v406
    %v408 = vlaneseq
    %v409 = vshrl.u32 %v408, 7
    %v410 = vsub.s32 5, %v409
    %v411 = vrot.slane %v65, %v410
    %v412 = vlaneseq
    %v413 = vshrl.u32 %v412, 7
    %v414 = vsub.s32 6, %v413
    %v415 = vrot.slane %v65, %v414
    %v416 = vlaneseq
    %v417 = vshrl.u32 %v416, 7
    %v418 = vsub.s32 7, %v417
    %v419 = vrot.slane %v65, %v418
    %v420 = vlaneseq
    %v421 = vshrl.u32 %v420, 7
    %v422 = vsub.s32 0, %v421
    %v423 = vrot.slane %v68, %v422
    %v424 = vlaneseq
    %v425 = vshrl.u32 %v424, 7
    %v426 = vsub.s32 1, %v425
    %v427 = vrot.slane %v68, %v426
    %v428 = vlaneseq
    %v429 = vshrl.u32 %v428, 7
    %v430 = vsub.s32 2, %v429
    %v431 = vrot.slane %v68, %v430
    %v432 = vlaneseq
    %v433 = vshrl.u32 %v432, 7
    %v434 = vsub.s32 3, %v433
    %v435 = vrot.slane %v68, %v434
    %v436 = vlaneseq
    %v437 = vshrl.u32 %v436, 7
    %v438 = vsub.s32 4, %v437
    %v439 = vrot.slane %v68, %v438
    %v440 = vlaneseq
    %v441 = vshrl.u32 %v440, 7
    %v442 = vsub.s32 5, %v441
    %v443 = vrot.slane %v68, %v442
    %v444 = vlaneseq
    %v445 = vshrl.u32 %v444, 7
    %v446 = vsub.s32 6, %v445
    %v447 = vrot.slane %v68, %v446
    %v448 = vlaneseq
    %v449 = vshrl.u32 %v448, 7
    %v450 = vsub.s32 7, %v449
    %v451 = vrot.slane %v68, %v450
    %v452 = vlaneseq
    %v453 = vshrl.u32 %v452, 7
    %v454 = vsub.s32 0, %v453
    %v455 = vrot.slane %v71, %v454
    %v456 = vlaneseq
    %v457 = vshrl.u32 %v456, 7
    %v458 = vsub.s32 1, %v457
    %v459 = vrot.slane %v71, %v458
    %v460 = vlaneseq
    %v461 = vshrl.u32 %v460, 7
    %v462 = vsub.s32 2, %v461
    %v463 = vrot.slane %v71, %v462
    %v464 = vlaneseq
    %v465 = vshrl.u32 %v464, 7
    %v466 = vsub.s32 3, %v465
    %v467 = vrot.slane %v71, %v466
    %v468 = vlaneseq
    %v469 = vshrl.u32 %v468, 7
    %v470 = vsub.s32 4, %v469
    %v471 = vrot.slane %v71, %v470
    %v472 = vlaneseq
    %v473 = vshrl.u32 %v472, 7
    %v474 = vsub.s32 5, %v473
    %v475 = vrot.slane %v71, %v474
    %v476 = vlaneseq
    %v477 = vshrl.u32 %v476, 7
    %v478 = vsub.s32 6, %v477
    %v479 = vrot.slane %v71, %v478
    %v480 = vlaneseq
    %v481 = vshrl.u32 %v480, 7
    %v482 = vsub.s32 7, %v481
    %v483 = vrot.slane %v71, %v482
    %v484 = vlaneseq
    %v485 = vshrl.u32 %v484, 7
    %v486 = vsub.s32 0, %v485
    %v487 = vrot.slane %v74, %v486
    %v488 = vlaneseq
    %v489 = vshrl.u32 %v488, 7
    %v490 = vsub.s32 1, %v489
    %v491 = vrot.slane %v74, %v490
    %v492 = vlaneseq
    %v493 = vshrl.u32 %v492, 7
    %v494 = vsub.s32 2, %v493
    %v495 = vrot.slane %v74, %v494
    %v496 = vlaneseq
    %v497 = vshrl.u32 %v496, 7
    %v498 = vsub.s32 3, %v497
    %v499 = vrot.slane %v74, %v498
    %v500 = vlaneseq
    %v501 = vshrl.u32 %v500, 7
    %v502 = vsub.s32 4, %v501
    %v503 = vrot.slane %v74, %v502
    %v504 = vlaneseq
    %v505 = vshrl.u32 %v504, 7
    %v506 = vsub.s32 5, %v505
    %v507 = vrot.slane %v74, %v506
    %v508 = vlaneseq
    %v509 = vshrl.u32 %v508, 7
    %v510 = vsub.s32 6, %v509
    %v511 = vrot.slane %v74, %v510
    %v512 = vlaneseq
    %v513 = vshrl.u32 %v512, 7
    %v514 = vsub.s32 7, %v513
    %v515 = vrot.slane %v74, %v514
    %v516 = vlaneseq
    %v517 = vshrl.u32 %v516, 7
    %v518 = vsub.s32 0, %v517
    %v519 = vrot.slane %v77, %v518
    %v520 = vlaneseq
    %v521 = vshrl.u32 %v520, 7
    %v522 = vsub.s32 1, %v521
    %v523 = vrot.slane %v77, %v522
    %v524 = vlaneseq
    %v525 = vshrl.u32 %v524, 7
    %v526 = vsub.s32 2, %v525
    %v527 = vrot.slane %v77, %v526
    %v528 = vlaneseq
    %v529 = vshrl.u32 %v528, 7
    %v530 = vsub.s32 3, %v529
    %v531 = vrot.slane %v77, %v530
    %v532 = vlaneseq
    %v533 = vshrl.u32 %v532, 7
    %v534 = vsub.s32 4, %v533
    %v535 = vrot.slane %v77, %v534
    %v536 = vlaneseq
    %v537 = vshrl.u32 %v536, 7
    %v538 = vsub.s32 5, %v537
    %v539 = vrot.slane %v77, %v538
    %v540 = vlaneseq
    %v541 = vshrl.u32 %v540, 7
    %v542 = vsub.s32 6, %v541
    %v543 = vrot.slane %v77, %v542
    %v544 = vlaneseq
    %v545 = vshrl.u32 %v544, 7
    %v546 = vsub.s32 7, %v545
    %v547 = vrot.slane %v77, %v546
    %v548 = vlaneseq
    %v549 = vshrl.u32 %v548, 7
    %v550 = vsub.s32 0, %v549
    %v551 = vrot.slane %v80, %v550
    %v552 = vlaneseq
    %v553 = vshrl.u32 %v552, 7
    %v554 = vsub.s32 1, %v553
    %v555 = vrot.slane %v80, %v554
    %v556 = vlaneseq
    %v557 = vshrl.u32 %v556, 7
    %v558 = vsub.s32 2, %v557
    %v559 = vrot.slane %v80, %v558
    %v560 = vlaneseq
    %v561 = vshrl.u32 %v560, 7
    %v562 = vsub.s32 3, %v561
    %v563 = vrot.slane %v80, %v562
    %v564 = vlaneseq
    %v565 = vshrl.u32 %v564, 7
    %v566 = vsub.s32 4, %v565
    %v567 = vrot.slane %v80, %v566
    %v568 = vlaneseq
    %v569 = vshrl.u32 %v568, 7
    %v570 = vsub.s32 5, %v569
    %v571 = vrot.slane %v80, %v570
    %v572 = vlaneseq
    %v573 = vshrl.u32 %v572, 7
    %v574 = vsub.s32 6, %v573
    %v575 = vrot.slane %v80, %v574
    %v576 = vlaneseq
    %v577 = vshrl.u32 %v576, 7
    %v578 = vsub.s32 7, %v577
    %v579 = vrot.slane %v80, %v578
    %v580 = vlaneseq
    %v581 = vshrl.u32 %v580, 7
    %v582 = vsub.s32 0, %v581
    %v583 = vrot.slane %v83, %v582
    %v584 = vlaneseq
    %v585 = vshrl.u32 %v584, 7
    %v586 = vsub.s32 1, %v585
    %v587 = vrot.slane %v83, %v586
    %v588 = vlaneseq
    %v589 = vshrl.u32 %v588, 7
    %v590 = vsub.s32 2, %v589
    %v591 = vrot.slane %v83, %v590
    %v592 = vlaneseq
    %v593 = vshrl.u32 %v592, 7
    %v594 = vsub.s32 3, %v593
    %v595 = vrot.slane %v83, %v594
    %v596 = vlaneseq
    %v597 = vshrl.u32 %v596, 7
    %v598 = vsub.s32 4, %v597
    %v599 = vrot.slane %v83, %v598
    %v600 = vlaneseq
    %v601 = vshrl.u32 %v600, 7
    %v602 = vsub.s32 5, %v601
    %v603 = vrot.slane %v83, %v602
    %v604 = vlaneseq
    %v605 = vshrl.u32 %v604, 7
    %v606 = vsub.s32 6, %v605
    %v607 = vrot.slane %v83, %v606
    %v608 = vlaneseq
    %v609 = vshrl.u32 %v608, 7
    %v610 = vsub.s32 7, %v609
    %v611 = vrot.slane %v83, %v610
    %v612 = vcombine.low %v103, %v107
    %v613 = vcombine.low %v111, %v115
    %v614 = vcombine.low %v119, %v123
    %v615 = vcombine.low %v127, %v131
    %v617 = vunpack.c.l.s4 1966171168
    %v618 = vunpack.c.0.s8 %v617
    %v619 = vlaneseq
    %v620 = vshrl.u32 %v619, 7
    %v621 = vsub.s32 %v618, %v620
    %v622 = vrot.slane %v612, %v621
    %v624 = vunpack.c.l.s4 1966171168
    %v625 = vunpack.c.0.s8 %v624
    %v626 = vlaneseq
    %v627 = vshrl.u32 %v626, 7
    %v628 = vsub.s32 %v625, %v627
    %v629 = vrot.slane %v613, %v628
    %v631 = vunpack.c.l.s4 1966171168
    %v632 = vunpack.c.0.s8 %v631
    %v633 = vlaneseq
    %v634 = vshrl.u32 %v633, 7
    %v635 = vsub.s32 %v632, %v634
    %v636 = vrot.slane %v614, %v635
    %v638 = vunpack.c.l.s4 1966171168
    %v639 = vunpack.c.0.s8 %v638
    %v640 = vlaneseq
    %v641 = vshrl.u32 %v640, 7
    %v642 = vsub.s32 %v639, %v641
    %v643 = vrot.slane %v615, %v642
    %v644 = vcombine.low %v622, %v629
    %v645 = vcombine.low %v636, %v643
    %v647 = vunpack.c.l.s4 1966171168
    %v648 = vunpack.c.0.s8 %v647
    %v649 = vlaneseq
    %v650 = vshrl.u32 %v649, 7
    %v651 = vsub.s32 %v648, %v650
    %v652 = vrot.slane %v644, %v651
    %v654 = vunpack.c.l.s4 1966171168
    %v655 = vunpack.c.0.s8 %v654
    %v656 = vlaneseq
    %v657 = vshrl.u32 %v656, 7
    %v658 = vsub.s32 %v655, %v657
    %v659 = vrot.slane %v645, %v658
    %v660 = vcombine.low %v652, %v659
    %v661 = vcombine.low %v135, %v139
    %v662 = vcombine.low %v143, %v147
    %v663 = vcombine.low %v151, %v155
    %v664 = vcombine.low %v159, %v163
    %v666 = vunpack.c.l.s4 1966171168
    %v667 = vunpack.c.0.s8 %v666
    %v668 = vlaneseq
    %v669 = vshrl.u32 %v668, 7
    %v670 = vsub.s32 %v667, %v669
    %v671 = vrot.slane %v661, %v670
    %v673 = vunpack.c.l.s4 1966171168
    %v674 = vunpack.c.0.s8 %v673
    %v675 = vlaneseq
    %v676 = vshrl.u32 %v675, 7
    %v677 = vsub.s32 %v674, %v676
    %v678 = vrot.slane %v662, %v677
    %v680 = vunpack.c.l.s4 1966171168
    %v681 = vunpack.c.0.s8 %v680
    %v682 = vlaneseq
    %v683 = vshrl.u32 %v682, 7
    %v684 = vsub.s32 %v681, %v683
    %v685 = vrot.slane %v663, %v684
    %v687 = vunpack.c.l.s4 1966171168
    %v688 = vunpack.c.0.s8 %v687
    %v689 = vlaneseq
    %v690 = vshrl.u32 %v689, 7
    %v691 = vsub.s32 %v688, %v690
    %v692 = vrot.slane %v664, %v691
    %v693 = vcombine.low %v671, %v678
    %v694 = vcombine.low %v685, %v692
    %v696 = vunpack.c.l.s4 1966171168
    %v697 = vunpack.c.0.s8 %v696
    %v698 = vlaneseq
    %v699 = vshrl.u32 %v698, 7
    %v700 = vsub.s32 %v697, %v699
    %v701 = vrot.slane %v693, %v700
    %v703 = vunpack.c.l.s4 1966171168
    %v704 = vunpack.c.0.s8 %v703
    %v705 = vlaneseq
    %v706 = vshrl.u32 %v705, 7
    %v707 = vsub.s32 %v704, %v706
    %v708 = vrot.slane %v694, %v707
    %v709 = vcombine.low %v701, %v708
    %v710 = vcombine.low %v167, %v171
    %v711 = vcombine.low %v175, %v179
    %v712 = vcombine.low %v183, %v187
    %v713 = vcombine.low %v191, %v195
    %v715 = vunpack.c.l.s4 1966171168
    %v716 = vunpack.c.0.s8 %v715
    %v717 = vlaneseq
    %v718 = vshrl.u32 %v717, 7
    %v719 = vsub.s32 %v716, %v718
    %v720 = vrot.slane %v710, %v719
    %v722 = vunpack.c.l.s4 1966171168
    %v723 = vunpack.c.0.s8 %v722
    %v724 = vlaneseq
    %v725 = vshrl.u32 %v724, 7
    %v726 = vsub.s32 %v723, %v725
    %v727 = vrot.slane %v711, %v726
    %v729 = vunpack.c.l.s4 1966171168
    %v730 = vunpack.c.0.s8 %v729
    %v731 = vlaneseq
    %v732 = vshrl.u32 %v731, 7
    %v733 = vsub.s32 %v730, %v732
    %v734 = vrot.slane %v712, %v733
    %v736 = vunpack.c.l.s4 1966171168
    %v737 = vunpack.c.0.s8 %v736
    %v738 = vlaneseq
    %v739 = vshrl.u32 %v738, 7
    %v740 = vsub.s32 %v737, %v739
    %v741 = vrot.slane %v713, %v740
    %v742 = vcombine.low %v720, %v727
    %v743 = vcombine.low %v734, %v741
    %v745 = vunpack.c.l.s4 1966171168
    %v746 = vunpack.c.0.s8 %v745
    %v747 = vlaneseq
    %v748 = vshrl.u32 %v747, 7
    %v749 = vsub.s32 %v746, %v748
    %v750 = vrot.slane %v742, %v749
    %v752 = vunpack.c.l.s4 1966171168
    %v753 = vunpack.c.0.s8 %v752
    %v754 = vlaneseq
    %v755 = vshrl.u32 %v754, 7
    %v756 = vsub.s32 %v753, %v755
    %v757 = vrot.slane %v743, %v756
    %v758 = vcombine.low %v750, %v757
    %v759 = vcombine.low %v199, %v203
    %v760 = vcombine.low %v207, %v211
    %v761 = vcombine.low %v215, %v219
    %v762 = vcombine.low %v223, %v227
    %v764 = vunpack.c.l.s4 1966171168
    %v765 = vunpack.c.0.s8 %v764
    %v766 = vlaneseq
    %v767 = vshrl.u32 %v766, 7
    %v768 = vsub.s32 %v765, %v767
    %v769 = vrot.slane %v759, %v768
    %v771 = vunpack.c.l.s4 1966171168
    %v772 = vunpack.c.0.s8 %v771
    %v773 = vlaneseq
    %v774 = vshrl.u32 %v773, 7
    %v775 = vsub.s32 %v772, %v774
    %v776 = vrot.slane %v760, %v775
    %v778 = vunpack.c.l.s4 1966171168
    %v779 = vunpack.c.0.s8 %v778
    %v780 = vlaneseq
    %v781 = vshrl.u32 %v780, 7
    %v782 = vsub.s32 %v779, %v781
    %v783 = vrot.slane %v761, %v782
    %v785 = vunpack.c.l.s4 1966171168
    %v786 = vunpack.c.0.s8 %v785
    %v787 = vlaneseq
    %v788 = vshrl.u32 %v787, 7
    %v789 = vsub.s32 %v786, %v788
    %v790 = vrot.slane %v762, %v789
    %v791 = vcombine.low %v769, %v776
    %v792 = vcombine.low %v783, %v790
    %v794 = vunpack.c.l.s4 1966171168
    %v795 = vunpack.c.0.s8 %v794
    %v796 = vlaneseq
    %v797 = vshrl.u32 %v796, 7
    %v798 = vsub.s32 %v795, %v797
    %v799 = vrot.slane %v791, %v798
    %v801 = vunpack.c.l.s4 1966171168
    %v802 = vunpack.c.0.s8 %v801
    %v803 = vlaneseq
    %v804 = vshrl.u32 %v803, 7
    %v805 = vsub.s32 %v802, %v804
    %v806 = vrot.slane %v792, %v805
    %v807 = vcombine.low %v799, %v806
    %v808 = vcombine.low %v231, %v235
    %v809 = vcombine.low %v239, %v243
    %v810 = vcombine.low %v247, %v251
    %v811 = vcombine.low %v255, %v259
    %v813 = vunpack.c.l.s4 1966171168
    %v814 = vunpack.c.0.s8 %v813
    %v815 = vlaneseq
    %v816 = vshrl.u32 %v815, 7
    %v817 = vsub.s32 %v814, %v816
    %v818 = vrot.slane %v808, %v817
    %v820 = vunpack.c.l.s4 1966171168
    %v821 = vunpack.c.0.s8 %v820
    %v822 = vlaneseq
    %v823 = vshrl.u32 %v822, 7
    %v824 = vsub.s32 %v821, %v823
    %v825 = vrot.slane %v809, %v824
    %v827 = vunpack.c.l.s4 1966171168
    %v828 = vunpack.c.0.s8 %v827
    %v829 = vlaneseq
    %v830 = vshrl.u32 %v829, 7
    %v831 = vsub.s32 %v828, %v830
    %v832 = vrot.slane %v810, %v831
    %v834 = vunpack.c.l.s4 1966171168
    %v835 = vunpack.c.0.s8 %v834
    %v836 = vlaneseq
    %v837 = vshrl.u32 %v836, 7
    %v838 = vsub.s32 %v835, %v837
    %v839 = vrot.slane %v811, %v838
    %v840 = vcombine.low %v818, %v825
    %v841 = vcombine.low %v832, %v839
    %v843 = vunpack.c.l.s4 1966171168
    %v844 = vunpack.c.0.s8 %v843
    %v845 = vlaneseq
    %v846 = vshrl.u32 %v845, 7
    %v847 = vsub.s32 %v844, %v846
    %v848 = vrot.slane %v840, %v847
    %v850 = vunpack.c.l.s4 1966171168
    %v851 = vunpack.c.0.s8 %v850
    %v852 = vlaneseq
    %v853 = vshrl.u32 %v852, 7
    %v854 = vsub.s32 %v851, %v853
    %v855 = vrot.slane %v841, %v854
    %v856 = vcombine.low %v848, %v855
    %v857 = vcombine.low %v263, %v267
    %v858 = vcombine.low %v271, %v275
    %v859 = vcombine.low %v279, %v283
    %v860 = vcombine.low %v287, %v291
    %v862 = vunpack.c.l.s4 1966171168
    %v863 = vunpack.c.0.s8 %v862
    %v864 = vlaneseq
    %v865 = vshrl.u32 %v864, 7
    %v866 = vsub.s32 %v863, %v865
    %v867 = vrot.slane %v857, %v866
    %v869 = vunpack.c.l.s4 1966171168
    %v870 = vunpack.c.0.s8 %v869
    %v871 = vlaneseq
    %v872 = vshrl.u32 %v871, 7
    %v873 = vsub.s32 %v870, %v872
    %v874 = vrot.slane %v858, %v873
    %v876 = vunpack.c.l.s4 1966171168
    %v877 = vunpack.c.0.s8 %v876
    %v878 = vlaneseq
    %v879 = vshrl.u32 %v878, 7
    %v880 = vsub.s32 %v877, %v879
    %v881 = vrot.slane %v859, %v880
    %v883 = vunpack.c.l.s4 1966171168
    %v884 = vunpack.c.0.s8 %v883
    %v885 = vlaneseq
    %v886 = vshrl.u32 %v885, 7
    %v887 = vsub.s32 %v884, %v886
    %v888 = vrot.slane %v860, %v887
    %v889 = vcombine.low %v867, %v874
    %v890 = vcombine.low %v881, %v888
    %v892 = vunpack.c.l.s4 1966171168
    %v893 = vunpack.c.0.s8 %v892
    %v894 = vlaneseq
    %v895 = vshrl.u32 %v894, 7
    %v896 = vsub.s32 %v893, %v895
    %v897 = vrot.slane %v889, %v896
    %v899 = vunpack.c.l.s4 1966171168
    %v900 = vunpack.c.0.s8 %v899
    %v901 = vlaneseq
    %v902 = vshrl.u32 %v901, 7
    %v903 = vsub.s32 %v900, %v902
    %v904 = vrot.slane %v890, %v903
    %v905 = vcombine.low %v897, %v904
    %v906 = vcombine.low %v295, %v299
    %v907 = vcombine.low %v303, %v307
    %v908 = vcombine.low %v311, %v315
    %v909 = vcombine.low %v319, %v323
    %v911 = vunpack.c.l.s4 1966171168
    %v912 = vunpack.c.0.s8 %v911
    %v913 = vlaneseq
    %v914 = vshrl.u32 %v913, 7
    %v915 = vsub.s32 %v912, %v914
    %v916 = vrot.slane %v906, %v915
    %v918 = vunpack.c.l.s4 1966171168
    %v919 = vunpack.c.0.s8 %v918
    %v920 = vlaneseq
    %v921 = vshrl.u32 %v920, 7
    %v922 = vsub.s32 %v919, %v921
    %v923 = vrot.slane %v907, %v922
    %v925 = vunpack.c.l.s4 1966171168
    %v926 = vunpack.c.0.s8 %v925
    %v927 = vlaneseq
    %v928 = vshrl.u32 %v927, 7
    %v929 = vsub.s32 %v926, %v928
    %v930 = vrot.slane %v908, %v929
    %v932 = vunpack.c.l.s4 1966171168
    %v933 = vunpack.c.0.s8 %v932
    %v934 = vlaneseq
    %v935 = vshrl.u32 %v934, 7
    %v936 = vsub.s32 %v933, %v935
    %v937 = vrot.slane %v909, %v936
    %v938 = vcombine.low %v916, %v923
    %v939 = vcombine.low %v930, %v937
    %v941 = vunpack.c.l.s4 1966171168
    %v942 = vunpack.c.0.s8 %v941
    %v943 = vlaneseq
    %v944 = vshrl.u32 %v943, 7
    %v945 = vsub.s32 %v942, %v944
    %v946 = vrot.slane %v938, %v945
    %v948 = vunpack.c.l.s4 1966171168
    %v949 = vunpack.c.0.s8 %v948
    %v950 = vlaneseq
    %v951 = vshrl.u32 %v950, 7
    %v952 = vsub.s32 %v949, %v951
    %v953 = vrot.slane %v939, %v952
    %v954 = vcombine.low %v946, %v953
    %v955 = vcombine.low %v327, %v331
    %v956 = vcombine.low %v335, %v339
    %v957 = vcombine.low %v343, %v347
    %v958 = vcombine.low %v351, %v355
    %v960 = vunpack.c.l.s4 1966171168
    %v961 = vunpack.c.0.s8 %v960
    %v962 = vlaneseq
    %v963 = vshrl.u32 %v962, 7
    %v964 = vsub.s32 %v961, %v963
    %v965 = vrot.slane %v955, %v964
    %v967 = vunpack.c.l.s4 1966171168
    %v968 = vunpack.c.0.s8 %v967
    %v969 = vlaneseq
    %v970 = vshrl.u32 %v969, 7
    %v971 = vsub.s32 %v968, %v970
    %v972 = vrot.slane %v956, %v971
    %v974 = vunpack.c.l.s4 1966171168
    %v975 = vunpack.c.0.s8 %v974
    %v976 = vlaneseq
    %v977 = vshrl.u32 %v976, 7
    %v978 = vsub.s32 %v975, %v977
    %v979 = vrot.slane %v957, %v978
    %v981 = vunpack.c.l.s4 1966171168
    %v982 = vunpack.c.0.s8 %v981
    %v983 = vlaneseq
    %v984 = vshrl.u32 %v983, 7
    %v985 = vsub.s32 %v982, %v984
    %v986 = vrot.slane %v958, %v985
    %v987 = vcombine.low %v965, %v972
    %v988 = vcombine.low %v979, %v986
    %v990 = vunpack.c.l.s4 1966171168
    %v991 = vunpack.c.0.s8 %v990
    %v992 = vlaneseq
    %v993 = vshrl.u32 %v992, 7
    %v994 = vsub.s32 %v991, %v993
    %v995 = vrot.slane %v987, %v994
    %v997 = vunpack.c.l.s4 1966171168
    %v998 = vunpack.c.0.s8 %v997
    %v999 = vlaneseq
    %v1000 = vshrl.u32 %v999, 7
    %v1001 = vsub.s32 %v998, %v1000
    %v1002 = vrot.slane %v988, %v1001
    %v1003 = vcombine.low %v995, %v1002
    %v1004 = vcombine.low %v359, %v363
    %v1005 = vcombine.low %v367, %v371
    %v1006 = vcombine.low %v375, %v379
    %v1007 = vcombine.low %v383, %v387
    %v1009 = vunpack.c.l.s4 1966171168
    %v1010 = vunpack.c.0.s8 %v1009
    %v1011 = vlaneseq
    %v1012 = vshrl.u32 %v1011, 7
    %v1013 = vsub.s32 %v1010, %v1012
    %v1014 = vrot.slane %v1004, %v1013
    %v1016 = vunpack.c.l.s4 1966171168
    %v1017 = vunpack.c.0.s8 %v1016
    %v1018 = vlaneseq
    %v1019 = vshrl.u32 %v1018, 7
    %v1020 = vsub.s32 %v1017, %v1019
    %v1021 = vrot.slane %v1005, %v1020
    %v1023 = vunpack.c.l.s4 1966171168
    %v1024 = vunpack.c.0.s8 %v1023
    %v1025 = vlaneseq
    %v1026 = vshrl.u32 %v1025, 7
    %v1027 = vsub.s32 %v1024, %v1026
    %v1028 = vrot.slane %v1006, %v1027
    %v1030 = vunpack.c.l.s4 1966171168
    %v1031 = vunpack.c.0.s8 %v1030
    %v1032 = vlaneseq
    %v1033 = vshrl.u32 %v1032, 7
    %v1034 = vsub.s32 %v1031, %v1033
    %v1035 = vrot.slane %v1007, %v1034
    %v1036 = vcombine.low %v1014, %v1021
    %v1037 = vcombine.low %v1028, %v1035
    %v1039 = vunpack.c.l.s4 1966171168
    %v1040 = vunpack.c.0.s8 %v1039
    %v1041 = vlaneseq
    %v1042 = vshrl.u32 %v1041, 7
    %v1043 = vsub.s32 %v1040, %v1042
    %v1044 = vrot.slane %v1036, %v1043
    %v1046 = vunpack.c.l.s4 1966171168
    %v1047 = vunpack.c.0.s8 %v1046
    %v1048 = vlaneseq
    %v1049 = vshrl.u32 %v1048, 7
    %v1050 = vsub.s32 %v1047, %v1049
    %v1051 = vrot.slane %v1037, %v1050
    %v1052 = vcombine.low %v1044, %v1051
    %v1053 = vcombine.low %v391, %v395
    %v1054 = vcombine.low %v399, %v403
    %v1055 = vcombine.low %v407, %v411
    %v1056 = vcombine.low %v415, %v419
    %v1058 = vunpack.c.l.s4 1966171168
    %v1059 = vunpack.c.0.s8 %v1058
    %v1060 = vlaneseq
    %v1061 = vshrl.u32 %v1060, 7
    %v1062 = vsub.s32 %v1059, %v1061
    %v1063 = vrot.slane %v1053, %v1062
    %v1065 = vunpack.c.l.s4 1966171168
    %v1066 = vunpack.c.0.s8 %v1065
    %v1067 = vlaneseq
    %v1068 = vshrl.u32 %v1067, 7
    %v1069 = vsub.s32 %v1066, %v1068
    %v1070 = vrot.slane %v1054, %v1069
    %v1072 = vunpack.c.l.s4 1966171168
    %v1073 = vunpack.c.0.s8 %v1072
    %v1074 = vlaneseq
    %v1075 = vshrl.u32 %v1074, 7
    %v1076 = vsub.s32 %v1073, %v1075
    %v1077 = vrot.slane %v1055, %v1076
    %v1079 = vunpack.c.l.s4 1966171168
    %v1080 = vunpack.c.0.s8 %v1079
    %v1081 = vlaneseq
    %v1082 = vshrl.u32 %v1081, 7
    %v1083 = vsub.s32 %v1080, %v1082
    %v1084 = vrot.slane %v1056, %v1083
    %v1085 = vcombine.low %v1063, %v1070
    %v1086 = vcombine.low %v1077, %v1084
    %v1088 = vunpack.c.l.s4 1966171168
    %v1089 = vunpack.c.0.s8 %v1088
    %v1090 = vlaneseq
    %v1091 = vshrl.u32 %v1090, 7
    %v1092 = vsub.s32 %v1089, %v1091
    %v1093 = vrot.slane %v1085, %v1092
    %v1095 = vunpack.c.l.s4 1966171168
    %v1096 = vunpack.c.0.s8 %v1095
    %v1097 = vlaneseq
    %v1098 = vshrl.u32 %v1097, 7
    %v1099 = vsub.s32 %v1096, %v1098
    %v1100 = vrot.slane %v1086, %v1099
    %v1101 = vcombine.low %v1093, %v1100
    %v1102 = vcombine.low %v423, %v427
    %v1103 = vcombine.low %v431, %v435
    %v1104 = vcombine.low %v439, %v443
    %v1105 = vcombine.low %v447, %v451
    %v1107 = vunpack.c.l.s4 1966171168
    %v1108 = vunpack.c.0.s8 %v1107
    %v1109 = vlaneseq
    %v1110 = vshrl.u32 %v1109, 7
    %v1111 = vsub.s32 %v1108, %v1110
    %v1112 = vrot.slane %v1102, %v1111
    %v1114 = vunpack.c.l.s4 1966171168
    %v1115 = vunpack.c.0.s8 %v1114
    %v1116 = vlaneseq
    %v1117 = vshrl.u32 %v1116, 7
    %v1118 = vsub.s32 %v1115, %v1117
    %v1119 = vrot.slane %v1103, %v1118
    %v1121 = vunpack.c.l.s4 1966171168
    %v1122 = vunpack.c.0.s8 %v1121
    %v1123 = vlaneseq
    %v1124 = vshrl.u32 %v1123, 7
    %v1125 = vsub.s32 %v1122, %v1124
    %v1126 = vrot.slane %v1104, %v1125
    %v1128 = vunpack.c.l.s4 1966171168
    %v1129 = vunpack.c.0.s8 %v1128
    %v1130 = vlaneseq
    %v1131 = vshrl.u32 %v1130, 7
    %v1132 = vsub.s32 %v1129, %v1131
    %v1133 = vrot.slane %v1105, %v1132
    %v1134 = vcombine.low %v1112, %v1119
    %v1135 = vcombine.low %v1126, %v1133
    %v1137 = vunpack.c.l.s4 1966171168
    %v1138 = vunpack.c.0.s8 %v1137
    %v1139 = vlaneseq
    %v1140 = vshrl.u32 %v1139, 7
    %v1141 = vsub.s32 %v1138, %v1140
    %v1142 = vrot.slane %v1134, %v1141
    %v1144 = vunpack.c.l.s4 1966171168
    %v1145 = vunpack.c.0.s8 %v1144
    %v1146 = vlaneseq
    %v1147 = vshrl.u32 %v1146, 7
    %v1148 = vsub.s32 %v1145, %v1147
    %v1149 = vrot.slane %v1135, %v1148
    %v1150 = vcombine.low %v1142, %v1149
    %v1151 = vcombine.low %v455, %v459
    %v1152 = vcombine.low %v463, %v467
    %v1153 = vcombine.low %v471, %v475
    %v1154 = vcombine.low %v479, %v483
    %v1156 = vunpack.c.l.s4 1966171168
    %v1157 = vunpack.c.0.s8 %v1156
    %v1158 = vlaneseq
    %v1159 = vshrl.u32 %v1158, 7
    %v1160 = vsub.s32 %v1157, %v1159
    %v1161 = vrot.slane %v1151, %v1160
    %v1163 = vunpack.c.l.s4 1966171168
    %v1164 = vunpack.c.0.s8 %v1163
    %v1165 = vlaneseq
    %v1166 = vshrl.u32 %v1165, 7
    %v1167 = vsub.s32 %v1164, %v1166
    %v1168 = vrot.slane %v1152, %v1167
    %v1170 = vunpack.c.l.s4 1966171168
    %v1171 = vunpack.c.0.s8 %v1170
    %v1172 = vlaneseq
    %v1173 = vshrl.u32 %v1172, 7
    %v1174 = vsub.s32 %v1171, %v1173
    %v1175 = vrot.slane %v1153, %v1174
    %v1177 = vunpack.c.l.s4 1966171168
    %v1178 = vunpack.c.0.s8 %v1177
    %v1179 = vlaneseq
    %v1180 = vshrl.u32 %v1179, 7
    %v1181 = vsub.s32 %v1178, %v1180
    %v1182 = vrot.slane %v1154, %v1181
    %v1183 = vcombine.low %v1161, %v1168
    %v1184 = vcombine.low %v1175, %v1182
    %v1186 = vunpack.c.l.s4 1966171168
    %v1187 = vunpack.c.0.s8 %v1186
    %v1188 = vlaneseq
    %v1189 = vshrl.u32 %v1188, 7
    %v1190 = vsub.s32 %v1187, %v1189
    %v1191 = vrot.slane %v1183, %v1190
    %v1193 = vunpack.c.l.s4 1966171168
    %v1194 = vunpack.c.0.s8 %v1193
    %v1195 = vlaneseq
    %v1196 = vshrl.u32 %v1195, 7
    %v1197 = vsub.s32 %v1194, %v1196
    %v1198 = vrot.slane %v1184, %v1197
    %v1199 = vcombine.low %v1191, %v1198
    %v1200 = vcombine.low %v487, %v491
    %v1201 = vcombine.low %v495, %v499
    %v1202 = vcombine.low %v503, %v507
    %v1203 = vcombine.low %v511, %v515
    %v1205 = vunpack.c.l.s4 1966171168
    %v1206 = vunpack.c.0.s8 %v1205
    %v1207 = vlaneseq
    %v1208 = vshrl.u32 %v1207, 7
    %v1209 = vsub.s32 %v1206, %v1208
    %v1210 = vrot.slane %v1200, %v1209
    %v1212 = vunpack.c.l.s4 1966171168
    %v1213 = vunpack.c.0.s8 %v1212
    %v1214 = vlaneseq
    %v1215 = vshrl.u32 %v1214, 7
    %v1216 = vsub.s32 %v1213, %v1215
    %v1217 = vrot.slane %v1201, %v1216
    %v1219 = vunpack.c.l.s4 1966171168
    %v1220 = vunpack.c.0.s8 %v1219
    %v1221 = vlaneseq
    %v1222 = vshrl.u32 %v1221, 7
    %v1223 = vsub.s32 %v1220, %v1222
    %v1224 = vrot.slane %v1202, %v1223
    %v1226 = vunpack.c.l.s4 1966171168
    %v1227 = vunpack.c.0.s8 %v1226
    %v1228 = vlaneseq
    %v1229 = vshrl.u32 %v1228, 7
    %v1230 = vsub.s32 %v1227, %v1229
    %v1231 = vrot.slane %v1203, %v1230
    %v1232 = vcombine.low %v1210, %v1217
    %v1233 = vcombine.low %v1224, %v1231
    %v1235 = vunpack.c.l.s4 1966171168
    %v1236 = vunpack.c.0.s8 %v1235
    %v1237 = vlaneseq
    %v1238 = vshrl.u32 %v1237, 7
    %v1239 = vsub.s32 %v1236, %v1238
    %v1240 = vrot.slane %v1232, %v1239
    %v1242 = vunpack.c.l.s4 1966171168
    %v1243 = vunpack.c.0.s8 %v1242
    %v1244 = vlaneseq
    %v1245 = vshrl.u32 %v1244, 7
    %v1246 = vsub.s32 %v1243, %v1245
    %v1247 = vrot.slane %v1233, %v1246
    %v1248 = vcombine.low %v1240, %v1247
    %v1249 = vcombine.low %v519, %v523
    %v1250 = vcombine.low %v527, %v531
    %v1251 = vcombine.low %v535, %v539
    %v1252 = vcombine.low %v543, %v547
    %v1254 = vunpack.c.l.s4 1966171168
    %v1255 = vunpack.c.0.s8 %v1254
    %v1256 = vlaneseq
    %v1257 = vshrl.u32 %v1256, 7
    %v1258 = vsub.s32 %v1255, %v1257
    %v1259 = vrot.slane %v1249, %v1258
    %v1261 = vunpack.c.l.s4 1966171168
    %v1262 = vunpack.c.0.s8 %v1261
    %v1263 = vlaneseq
    %v1264 = vshrl.u32 %v1263, 7
    %v1265 = vsub.s32 %v1262, %v1264
    %v1266 = vrot.slane %v1250, %v1265
    %v1268 = vunpack.c.l.s4 1966171168
    %v1269 = vunpack.c.0.s8 %v1268
    %v1270 = vlaneseq
    %v1271 = vshrl.u32 %v1270, 7
    %v1272 = vsub.s32 %v1269, %v1271
    %v1273 = vrot.slane %v1251, %v1272
    %v1275 = vunpack.c.l.s4 1966171168
    %v1276 = vunpack.c.0.s8 %v1275
    %v1277 = vlaneseq
    %v1278 = vshrl.u32 %v1277, 7
    %v1279 = vsub.s32 %v1276, %v1278
    %v1280 = vrot.slane %v1252, %v1279
    %v1281 = vcombine.low %v1259, %v1266
    %v1282 = vcombine.low %v1273, %v1280
    %v1284 = vunpack.c.l.s4 1966171168
    %v1285 = vunpack.c.0.s8 %v1284
    %v1286 = vlaneseq
    %v1287 = vshrl.u32 %v1286, 7
    %v1288 = vsub.s32 %v1285, %v1287
    %v1289 = vrot.slane %v1281, %v1288
    %v1291 = vunpack.c.l.s4 1966171168
    %v1292 = vunpack.c.0.s8 %v1291
    %v1293 = vlaneseq
    %v1294 = vshrl.u32 %v1293, 7
    %v1295 = vsub.s32 %v1292, %v1294
    %v1296 = vrot.slane %v1282, %v1295
    %v1297 = vcombine.low %v1289, %v1296
    %v1298 = vcombine.low %v551, %v555
    %v1299 = vcombine.low %v559, %v563
    %v1300 = vcombine.low %v567, %v571
    %v1301 = vcombine.low %v575, %v579
    %v1303 = vunpack.c.l.s4 1966171168
    %v1304 = vunpack.c.0.s8 %v1303
    %v1305 = vlaneseq
    %v1306 = vshrl.u32 %v1305, 7
    %v1307 = vsub.s32 %v1304, %v1306
    %v1308 = vrot.slane %v1298, %v1307
    %v1310 = vunpack.c.l.s4 1966171168
    %v1311 = vunpack.c.0.s8 %v1310
    %v1312 = vlaneseq
    %v1313 = vshrl.u32 %v1312, 7
    %v1314 = vsub.s32 %v1311, %v1313
    %v1315 = vrot.slane %v1299, %v1314
    %v1317 = vunpack.c.l.s4 1966171168
    %v1318 = vunpack.c.0.s8 %v1317
    %v1319 = vlaneseq
    %v1320 = vshrl.u32 %v1319, 7
    %v1321 = vsub.s32 %v1318, %v1320
    %v1322 = vrot.slane %v1300, %v1321
    %v1324 = vunpack.c.l.s4 1966171168
    %v1325 = vunpack.c.0.s8 %v1324
    %v1326 = vlaneseq
    %v1327 = vshrl.u32 %v1326, 7
    %v1328 = vsub.s32 %v1325, %v1327
    %v1329 = vrot.slane %v1301, %v1328
    %v1330 = vcombine.low %v1308, %v1315
    %v1331 = vcombine.low %v1322, %v1329
    %v1333 = vunpack.c.l.s4 1966171168
    %v1334 = vunpack.c.0.s8 %v1333
    %v1335 = vlaneseq
    %v1336 = vshrl.u32 %v1335, 7
    %v1337 = vsub.s32 %v1334, %v1336
    %v1338 = vrot.slane %v1330, %v1337
    %v1340 = vunpack.c.l.s4 1966171168
    %v1341 = vunpack.c.0.s8 %v1340
    %v1342 = vlaneseq
    %v1343 = vshrl.u32 %v1342, 7
    %v1344 = vsub.s32 %v1341, %v1343
    %v1345 = vrot.slane %v1331, %v1344
    %v1346 = vcombine.low %v1338, %v1345
    %v1347 = vcombine.low %v583, %v587
    %v1348 = vcombine.low %v591, %v595
    %v1349 = vcombine.low %v599, %v603
    %v1350 = vcombine.low %v607, %v611
    %v1352 = vunpack.c.l.s4 1966171168
    %v1353 = vunpack.c.0.s8 %v1352
    %v1354 = vlaneseq
    %v1355 = vshrl.u32 %v1354, 7
    %v1356 = vsub.s32 %v1353, %v1355
    %v1357 = vrot.slane %v1347, %v1356
    %v1359 = vunpack.c.l.s4 1966171168
    %v1360 = vunpack.c.0.s8 %v1359
    %v1361 = vlaneseq
    %v1362 = vshrl.u32 %v1361, 7
    %v1363 = vsub.s32 %v1360, %v1362
    %v1364 = vrot.slane %v1348, %v1363
    %v1366 = vunpack.c.l.s4 1966171168
    %v1367 = vunpack.c.0.s8 %v1366
    %v1368 = vlaneseq
    %v1369 = vshrl.u32 %v1368, 7
    %v1370 = vsub.s32 %v1367, %v1369
    %v1371 = vrot.slane %v1349, %v1370
    %v1373 = vunpack.c.l.s4 1966171168
    %v1374 = vunpack.c.0.s8 %v1373
    %v1375 = vlaneseq
    %v1376 = vshrl.u32 %v1375, 7
    %v1377 = vsub.s32 %v1374, %v1376
    %v1378 = vrot.slane %v1350, %v1377
    %v1379 = vcombine.low %v1357, %v1364
    %v1380 = vcombine.low %v1371, %v1378
    %v1382 = vunpack.c.l.s4 1966171168
    %v1383 = vunpack.c.0.s8 %v1382
    %v1384 = vlaneseq
    %v1385 = vshrl.u32 %v1384, 7
    %v1386 = vsub.s32 %v1383, %v1385
    %v1387 = vrot.slane %v1379, %v1386
    %v1389 = vunpack.c.l.s4 1966171168
    %v1390 = vunpack.c.0.s8 %v1389
    %v1391 = vlaneseq
    %v1392 = vshrl.u32 %v1391, 7
    %v1393 = vsub.s32 %v1390, %v1392
    %v1394 = vrot.slane %v1380, %v1393
    %v1395 = vcombine.low %v1387, %v1394
    %1396 = vset.pattern.permute.xlu0 0
    %1397 = vperm.xlu0 %1396, %v660
    %v1398 = vpop.permute.xlu0 %1397
    %1399 = vset.pattern.permute.xlu0 0
    %1400 = vperm.xlu0 %1399, %v709
    %v1401 = vpop.permute.xlu0 %1400
    %1402 = vset.pattern.permute.xlu0 0
    %1403 = vperm.xlu0 %1402, %v758
    %v1404 = vpop.permute.xlu0 %1403
    %1405 = vset.pattern.permute.xlu0 0
    %1406 = vperm.xlu0 %1405, %v807
    %v1407 = vpop.permute.xlu0 %1406
    %1408 = vset.pattern.permute.xlu0 0
    %1409 = vperm.xlu0 %1408, %v856
    %v1410 = vpop.permute.xlu0 %1409
    %1411 = vset.pattern.permute.xlu0 0
    %1412 = vperm.xlu0 %1411, %v905
    %v1413 = vpop.permute.xlu0 %1412
    %1414 = vset.pattern.permute.xlu0 0
    %1415 = vperm.xlu0 %1414, %v954
    %v1416 = vpop.permute.xlu0 %1415
    %1417 = vset.pattern.permute.xlu0 0
    %1418 = vperm.xlu0 %1417, %v1003
    %v1419 = vpop.permute.xlu0 %1418
    %1420 = vset.pattern.permute.xlu0 0
    %1421 = vperm.xlu0 %1420, %v1052
    %v1422 = vpop.permute.xlu0 %1421
    %1423 = vset.pattern.permute.xlu0 0
    %1424 = vperm.xlu0 %1423, %v1101
    %v1425 = vpop.permute.xlu0 %1424
    %1426 = vset.pattern.permute.xlu0 0
    %1427 = vperm.xlu0 %1426, %v1150
    %v1428 = vpop.permute.xlu0 %1427
    %1429 = vset.pattern.permute.xlu0 0
    %1430 = vperm.xlu0 %1429, %v1199
    %v1431 = vpop.permute.xlu0 %1430
    %1432 = vset.pattern.permute.xlu0 0
    %1433 = vperm.xlu0 %1432, %v1248
    %v1434 = vpop.permute.xlu0 %1433
    %1435 = vset.pattern.permute.xlu0 0
    %1436 = vperm.xlu0 %1435, %v1297
    %v1437 = vpop.permute.xlu0 %1436
    %1438 = vset.pattern.permute.xlu0 0
    %1439 = vperm.xlu0 %1438, %v1346
    %v1440 = vpop.permute.xlu0 %1439
    %1441 = vset.pattern.permute.xlu0 0
    %1442 = vperm.xlu0 %1441, %v1395
    %v1443 = vpop.permute.xlu0 %1442
    %v1444 = vlaneseq
    %v1445 = vand.u32 %v1444, 127
    %v1446 = vlaneseq
    %v1447 = vshrl.u32 %v1446, 7
    %v1448 = vsub.s32 %v1445, %v1447
    %v1449 = vrot.slane %v1398, %v1448
    %v1450 = vadd.s32 %v1445, 4294967288
    %v1451 = vlaneseq
    %v1452 = vshrl.u32 %v1451, 7
    %v1453 = vsub.s32 %v1450, %v1452
    %v1454 = vrot.slane %v1401, %v1453
    %vm1455 = vcmask 130112
    %v1456 = vsel %vm1455, %v1454, %v1449
    %v1457 = vadd.s32 %v1445, 4294967280
    %v1458 = vlaneseq
    %v1459 = vshrl.u32 %v1458, 7
    %v1460 = vsub.s32 %v1457, %v1459
    %v1461 = vrot.slane %v1404, %v1460
    %vm1462 = vcmask 195712
    %v1463 = vsel %vm1462, %v1461, %v1456
    %v1464 = vadd.s32 %v1445, 4294967272
    %v1465 = vlaneseq
    %v1466 = vshrl.u32 %v1465, 7
    %v1467 = vsub.s32 %v1464, %v1466
    %v1468 = vrot.slane %v1407, %v1467
    %vm1469 = vcmask 261312
    %v1470 = vsel %vm1469, %v1468, %v1463
    %v1471 = vadd.s32 %v1445, 4294967264
    %v1472 = vlaneseq
    %v1473 = vshrl.u32 %v1472, 7
    %v1474 = vsub.s32 %v1471, %v1473
    %v1475 = vrot.slane %v1410, %v1474
    %vm1476 = vcmask 326912
    %v1477 = vsel %vm1476, %v1475, %v1470
    %v1478 = vadd.s32 %v1445, 4294967256
    %v1479 = vlaneseq
    %v1480 = vshrl.u32 %v1479, 7
    %v1481 = vsub.s32 %v1478, %v1480
    %v1482 = vrot.slane %v1413, %v1481
    %vm1483 = vcmask 392512
    %v1484 = vsel %vm1483, %v1482, %v1477
    %v1485 = vadd.s32 %v1445, 4294967248
    %v1486 = vlaneseq
    %v1487 = vshrl.u32 %v1486, 7
    %v1488 = vsub.s32 %v1485, %v1487
    %v1489 = vrot.slane %v1416, %v1488
    %vm1490 = vcmask 458112
    %v1491 = vsel %vm1490, %v1489, %v1484
    %v1492 = vadd.s32 %v1445, 4294967240
    %v1493 = vlaneseq
    %v1494 = vshrl.u32 %v1493, 7
    %v1495 = vsub.s32 %v1492, %v1494
    %v1496 = vrot.slane %v1419, %v1495
    %vm1497 = vcmask 523712
    %v1498 = vsel %vm1497, %v1496, %v1491
    %v1499 = vadd.s32 %v1445, 4294967232
    %v1500 = vlaneseq
    %v1501 = vshrl.u32 %v1500, 7
    %v1502 = vsub.s32 %v1499, %v1501
    %v1503 = vrot.slane %v1422, %v1502
    %vm1504 = vcmask 589312
    %v1505 = vsel %vm1504, %v1503, %v1498
    %v1506 = vadd.s32 %v1445, 4294967224
    %v1507 = vlaneseq
    %v1508 = vshrl.u32 %v1507, 7
    %v1509 = vsub.s32 %v1506, %v1508
    %v1510 = vrot.slane %v1425, %v1509
    %vm1511 = vcmask 654912
    %v1512 = vsel %vm1511, %v1510, %v1505
    %v1513 = vadd.s32 %v1445, 4294967216
    %v1514 = vlaneseq
    %v1515 = vshrl.u32 %v1514, 7
    %v1516 = vsub.s32 %v1513, %v1515
    %v1517 = vrot.slane %v1428, %v1516
    %vm1518 = vcmask 720512
    %v1519 = vsel %vm1518, %v1517, %v1512
    %v1520 = vadd.s32 %v1445, 4294967208
    %v1521 = vlaneseq
    %v1522 = vshrl.u32 %v1521, 7
    %v1523 = vsub.s32 %v1520, %v1522
    %v1524 = vrot.slane %v1431, %v1523
    %vm1525 = vcmask 786112
    %v1526 = vsel %vm1525, %v1524, %v1519
    %v1527 = vadd.s32 %v1445, 4294967200
    %v1528 = vlaneseq
    %v1529 = vshrl.u32 %v1528, 7
    %v1530 = vsub.s32 %v1527, %v1529
    %v1531 = vrot.slane %v1434, %v1530
    %vm1532 = vcmask 851712
    %v1533 = vsel %vm1532, %v1531, %v1526
    %v1534 = vadd.s32 %v1445, 4294967192
    %v1535 = vlaneseq
    %v1536 = vshrl.u32 %v1535, 7
    %v1537 = vsub.s32 %v1534, %v1536
    %v1538 = vrot.slane %v1437, %v1537
    %vm1539 = vcmask 917312
    %v1540 = vsel %vm1539, %v1538, %v1533
    %v1541 = vadd.s32 %v1445, 4294967184
    %v1542 = vlaneseq
    %v1543 = vshrl.u32 %v1542, 7
    %v1544 = vsub.s32 %v1541, %v1543
    %v1545 = vrot.slane %v1440, %v1544
    %vm1546 = vcmask 982912
    %v1547 = vsel %vm1546, %v1545, %v1540
    %v1548 = vadd.s32 %v1445, 4294967176
    %v1549 = vlaneseq
    %v1550 = vshrl.u32 %v1549, 7
    %v1551 = vsub.s32 %v1548, %v1550
    %v1552 = vrot.slane %v1443, %v1551
    %vm1553 = vcmask 1048512
    %v1554 = vsel %vm1553, %v1552, %v1547
    %v1556 = vunpack.c.l.s4 1966171168
    %v1557 = vunpack.c.0.s8 %v1556
    %v1558 = vlaneseq
    %v1559 = vshrl.u32 %v1558, 7
    %v1560 = vsub.s32 %v1557, %v1559
    %v1561 = vrot.slane %v1554, %v1560
    %v1563 = vunpack.c.l.s4 1966171168
    %v1564 = vunpack.c.0.s8 %v1563
    %v1565 = vlaneseq
    %v1566 = vshrl.u32 %v1565, 7
    %v1567 = vsub.s32 %v1564, %v1566
    %v1568 = vrot.slane %v1561, %v1567
    %v1570 = vadd.f32 %v34, %v1568
    %1571 = vst [vmem:[#allocation2] sm:$0x1] %v1570
    %v1572 = vld [vmem:[#allocation3] sm:$0x1]
    %v1573 = vmul.f32 %v18, %v18
    %v1574 = vmul.f32 %v19, %v19
    %v1575 = vmul.f32 %v20, %v20
    %v1576 = vmul.f32 %v21, %v21
    %v1577 = vmul.f32 %v22, %v22
    %v1578 = vmul.f32 %v23, %v23
    %v1579 = vmul.f32 %v24, %v24
    %v1580 = vmul.f32 %v25, %v25
    %v1581 = vmul.f32 %v26, %v26
    %v1582 = vmul.f32 %v27, %v27
    %v1583 = vmul.f32 %v28, %v28
    %v1584 = vmul.f32 %v29, %v29
    %v1585 = vmul.f32 %v30, %v30
    %v1586 = vmul.f32 %v31, %v31
    %v1587 = vmul.f32 %v32, %v32
    %v1588 = vmul.f32 %v33, %v33
    %v1589 = vsel %vm35, %v1573, 0.0
    %1590 = vadd.xlane.f32.xlu0 %v1589
    %v1591 = vpop.xlane.xlu0 %1590
    %v1592 = vsel %vm35, %v1574, 0.0
    %1593 = vadd.xlane.f32.xlu0 %v1592
    %v1594 = vpop.xlane.xlu0 %1593
    %v1595 = vsel %vm35, %v1575, 0.0
    %1596 = vadd.xlane.f32.xlu0 %v1595
    %v1597 = vpop.xlane.xlu0 %1596
    %v1598 = vsel %vm35, %v1576, 0.0
    %1599 = vadd.xlane.f32.xlu0 %v1598
    %v1600 = vpop.xlane.xlu0 %1599
    %v1601 = vsel %vm35, %v1577, 0.0
    %1602 = vadd.xlane.f32.xlu0 %v1601
    %v1603 = vpop.xlane.xlu0 %1602
    %v1604 = vsel %vm35, %v1578, 0.0
    %1605 = vadd.xlane.f32.xlu0 %v1604
    %v1606 = vpop.xlane.xlu0 %1605
    %v1607 = vsel %vm35, %v1579, 0.0
    %1608 = vadd.xlane.f32.xlu0 %v1607
    %v1609 = vpop.xlane.xlu0 %1608
    %v1610 = vsel %vm35, %v1580, 0.0
    %1611 = vadd.xlane.f32.xlu0 %v1610
    %v1612 = vpop.xlane.xlu0 %1611
    %v1613 = vsel %vm35, %v1581, 0.0
    %1614 = vadd.xlane.f32.xlu0 %v1613
    %v1615 = vpop.xlane.xlu0 %1614
    %v1616 = vsel %vm35, %v1582, 0.0
    %1617 = vadd.xlane.f32.xlu0 %v1616
    %v1618 = vpop.xlane.xlu0 %1617
    %v1619 = vsel %vm35, %v1583, 0.0
    %1620 = vadd.xlane.f32.xlu0 %v1619
    %v1621 = vpop.xlane.xlu0 %1620
    %v1622 = vsel %vm35, %v1584, 0.0
    %1623 = vadd.xlane.f32.xlu0 %v1622
    %v1624 = vpop.xlane.xlu0 %1623
    %v1625 = vsel %vm35, %v1585, 0.0
    %1626 = vadd.xlane.f32.xlu0 %v1625
    %v1627 = vpop.xlane.xlu0 %1626
    %v1628 = vsel %vm35, %v1586, 0.0
    %1629 = vadd.xlane.f32.xlu0 %v1628
    %v1630 = vpop.xlane.xlu0 %1629
    %v1631 = vsel %vm35, %v1587, 0.0
    %1632 = vadd.xlane.f32.xlu0 %v1631
    %v1633 = vpop.xlane.xlu0 %1632
    %v1634 = vsel %vm35, %v1588, 0.0
    %1635 = vadd.xlane.f32.xlu0 %v1634
    %v1636 = vpop.xlane.xlu0 %1635
    %v1653 = vlaneseq
    %v1654 = vshrl.u32 %v1653, 7
    %v1655 = vsub.s32 0, %v1654
    %v1656 = vrot.slane %v1591, %v1655
    %v1657 = vlaneseq
    %v1658 = vshrl.u32 %v1657, 7
    %v1659 = vsub.s32 1, %v1658
    %v1660 = vrot.slane %v1591, %v1659
    %v1661 = vlaneseq
    %v1662 = vshrl.u32 %v1661, 7
    %v1663 = vsub.s32 2, %v1662
    %v1664 = vrot.slane %v1591, %v1663
    %v1665 = vlaneseq
    %v1666 = vshrl.u32 %v1665, 7
    %v1667 = vsub.s32 3, %v1666
    %v1668 = vrot.slane %v1591, %v1667
    %v1669 = vlaneseq
    %v1670 = vshrl.u32 %v1669, 7
    %v1671 = vsub.s32 4, %v1670
    %v1672 = vrot.slane %v1591, %v1671
    %v1673 = vlaneseq
    %v1674 = vshrl.u32 %v1673, 7
    %v1675 = vsub.s32 5, %v1674
    %v1676 = vrot.slane %v1591, %v1675
    %v1677 = vlaneseq
    %v1678 = vshrl.u32 %v1677, 7
    %v1679 = vsub.s32 6, %v1678
    %v1680 = vrot.slane %v1591, %v1679
    %v1681 = vlaneseq
    %v1682 = vshrl.u32 %v1681, 7
    %v1683 = vsub.s32 7, %v1682
    %v1684 = vrot.slane %v1591, %v1683
    %v1685 = vlaneseq
    %v1686 = vshrl.u32 %v1685, 7
    %v1687 = vsub.s32 0, %v1686
    %v1688 = vrot.slane %v1594, %v1687
    %v1689 = vlaneseq
    %v1690 = vshrl.u32 %v1689, 7
    %v1691 = vsub.s32 1, %v1690
    %v1692 = vrot.slane %v1594, %v1691
    %v1693 = vlaneseq
    %v1694 = vshrl.u32 %v1693, 7
    %v1695 = vsub.s32 2, %v1694
    %v1696 = vrot.slane %v1594, %v1695
    %v1697 = vlaneseq
    %v1698 = vshrl.u32 %v1697, 7
    %v1699 = vsub.s32 3, %v1698
    %v1700 = vrot.slane %v1594, %v1699
    %v1701 = vlaneseq
    %v1702 = vshrl.u32 %v1701, 7
    %v1703 = vsub.s32 4, %v1702
    %v1704 = vrot.slane %v1594, %v1703
    %v1705 = vlaneseq
    %v1706 = vshrl.u32 %v1705, 7
    %v1707 = vsub.s32 5, %v1706
    %v1708 = vrot.slane %v1594, %v1707
    %v1709 = vlaneseq
    %v1710 = vshrl.u32 %v1709, 7
    %v1711 = vsub.s32 6, %v1710
    %v1712 = vrot.slane %v1594, %v1711
    %v1713 = vlaneseq
    %v1714 = vshrl.u32 %v1713, 7
    %v1715 = vsub.s32 7, %v1714
    %v1716 = vrot.slane %v1594, %v1715
    %v1717 = vlaneseq
    %v1718 = vshrl.u32 %v1717, 7
    %v1719 = vsub.s32 0, %v1718
    %v1720 = vrot.slane %v1597, %v1719
    %v1721 = vlaneseq
    %v1722 = vshrl.u32 %v1721, 7
    %v1723 = vsub.s32 1, %v1722
    %v1724 = vrot.slane %v1597, %v1723
    %v1725 = vlaneseq
    %v1726 = vshrl.u32 %v1725, 7
    %v1727 = vsub.s32 2, %v1726
    %v1728 = vrot.slane %v1597, %v1727
    %v1729 = vlaneseq
    %v1730 = vshrl.u32 %v1729, 7
    %v1731 = vsub.s32 3, %v1730
    %v1732 = vrot.slane %v1597, %v1731
    %v1733 = vlaneseq
    %v1734 = vshrl.u32 %v1733, 7
    %v1735 = vsub.s32 4, %v1734
    %v1736 = vrot.slane %v1597, %v1735
    %v1737 = vlaneseq
    %v1738 = vshrl.u32 %v1737, 7
    %v1739 = vsub.s32 5, %v1738
    %v1740 = vrot.slane %v1597, %v1739
    %v1741 = vlaneseq
    %v1742 = vshrl.u32 %v1741, 7
    %v1743 = vsub.s32 6, %v1742
    %v1744 = vrot.slane %v1597, %v1743
    %v1745 = vlaneseq
    %v1746 = vshrl.u32 %v1745, 7
    %v1747 = vsub.s32 7, %v1746
    %v1748 = vrot.slane %v1597, %v1747
    %v1749 = vlaneseq
    %v1750 = vshrl.u32 %v1749, 7
    %v1751 = vsub.s32 0, %v1750
    %v1752 = vrot.slane %v1600, %v1751
    %v1753 = vlaneseq
    %v1754 = vshrl.u32 %v1753, 7
    %v1755 = vsub.s32 1, %v1754
    %v1756 = vrot.slane %v1600, %v1755
    %v1757 = vlaneseq
    %v1758 = vshrl.u32 %v1757, 7
    %v1759 = vsub.s32 2, %v1758
    %v1760 = vrot.slane %v1600, %v1759
    %v1761 = vlaneseq
    %v1762 = vshrl.u32 %v1761, 7
    %v1763 = vsub.s32 3, %v1762
    %v1764 = vrot.slane %v1600, %v1763
    %v1765 = vlaneseq
    %v1766 = vshrl.u32 %v1765, 7
    %v1767 = vsub.s32 4, %v1766
    %v1768 = vrot.slane %v1600, %v1767
    %v1769 = vlaneseq
    %v1770 = vshrl.u32 %v1769, 7
    %v1771 = vsub.s32 5, %v1770
    %v1772 = vrot.slane %v1600, %v1771
    %v1773 = vlaneseq
    %v1774 = vshrl.u32 %v1773, 7
    %v1775 = vsub.s32 6, %v1774
    %v1776 = vrot.slane %v1600, %v1775
    %v1777 = vlaneseq
    %v1778 = vshrl.u32 %v1777, 7
    %v1779 = vsub.s32 7, %v1778
    %v1780 = vrot.slane %v1600, %v1779
    %v1781 = vlaneseq
    %v1782 = vshrl.u32 %v1781, 7
    %v1783 = vsub.s32 0, %v1782
    %v1784 = vrot.slane %v1603, %v1783
    %v1785 = vlaneseq
    %v1786 = vshrl.u32 %v1785, 7
    %v1787 = vsub.s32 1, %v1786
    %v1788 = vrot.slane %v1603, %v1787
    %v1789 = vlaneseq
    %v1790 = vshrl.u32 %v1789, 7
    %v1791 = vsub.s32 2, %v1790
    %v1792 = vrot.slane %v1603, %v1791
    %v1793 = vlaneseq
    %v1794 = vshrl.u32 %v1793, 7
    %v1795 = vsub.s32 3, %v1794
    %v1796 = vrot.slane %v1603, %v1795
    %v1797 = vlaneseq
    %v1798 = vshrl.u32 %v1797, 7
    %v1799 = vsub.s32 4, %v1798
    %v1800 = vrot.slane %v1603, %v1799
    %v1801 = vlaneseq
    %v1802 = vshrl.u32 %v1801, 7
    %v1803 = vsub.s32 5, %v1802
    %v1804 = vrot.slane %v1603, %v1803
    %v1805 = vlaneseq
    %v1806 = vshrl.u32 %v1805, 7
    %v1807 = vsub.s32 6, %v1806
    %v1808 = vrot.slane %v1603, %v1807
    %v1809 = vlaneseq
    %v1810 = vshrl.u32 %v1809, 7
    %v1811 = vsub.s32 7, %v1810
    %v1812 = vrot.slane %v1603, %v1811
    %v1813 = vlaneseq
    %v1814 = vshrl.u32 %v1813, 7
    %v1815 = vsub.s32 0, %v1814
    %v1816 = vrot.slane %v1606, %v1815
    %v1817 = vlaneseq
    %v1818 = vshrl.u32 %v1817, 7
    %v1819 = vsub.s32 1, %v1818
    %v1820 = vrot.slane %v1606, %v1819
    %v1821 = vlaneseq
    %v1822 = vshrl.u32 %v1821, 7
    %v1823 = vsub.s32 2, %v1822
    %v1824 = vrot.slane %v1606, %v1823
    %v1825 = vlaneseq
    %v1826 = vshrl.u32 %v1825, 7
    %v1827 = vsub.s32 3, %v1826
    %v1828 = vrot.slane %v1606, %v1827
    %v1829 = vlaneseq
    %v1830 = vshrl.u32 %v1829, 7
    %v1831 = vsub.s32 4, %v1830
    %v1832 = vrot.slane %v1606, %v1831
    %v1833 = vlaneseq
    %v1834 = vshrl.u32 %v1833, 7
    %v1835 = vsub.s32 5, %v1834
    %v1836 = vrot.slane %v1606, %v1835
    %v1837 = vlaneseq
    %v1838 = vshrl.u32 %v1837, 7
    %v1839 = vsub.s32 6, %v1838
    %v1840 = vrot.slane %v1606, %v1839
    %v1841 = vlaneseq
    %v1842 = vshrl.u32 %v1841, 7
    %v1843 = vsub.s32 7, %v1842
    %v1844 = vrot.slane %v1606, %v1843
    %v1845 = vlaneseq
    %v1846 = vshrl.u32 %v1845, 7
    %v1847 = vsub.s32 0, %v1846
    %v1848 = vrot.slane %v1609, %v1847
    %v1849 = vlaneseq
    %v1850 = vshrl.u32 %v1849, 7
    %v1851 = vsub.s32 1, %v1850
    %v1852 = vrot.slane %v1609, %v1851
    %v1853 = vlaneseq
    %v1854 = vshrl.u32 %v1853, 7
    %v1855 = vsub.s32 2, %v1854
    %v1856 = vrot.slane %v1609, %v1855
    %v1857 = vlaneseq
    %v1858 = vshrl.u32 %v1857, 7
    %v1859 = vsub.s32 3, %v1858
    %v1860 = vrot.slane %v1609, %v1859
    %v1861 = vlaneseq
    %v1862 = vshrl.u32 %v1861, 7
    %v1863 = vsub.s32 4, %v1862
    %v1864 = vrot.slane %v1609, %v1863
    %v1865 = vlaneseq
    %v1866 = vshrl.u32 %v1865, 7
    %v1867 = vsub.s32 5, %v1866
    %v1868 = vrot.slane %v1609, %v1867
    %v1869 = vlaneseq
    %v1870 = vshrl.u32 %v1869, 7
    %v1871 = vsub.s32 6, %v1870
    %v1872 = vrot.slane %v1609, %v1871
    %v1873 = vlaneseq
    %v1874 = vshrl.u32 %v1873, 7
    %v1875 = vsub.s32 7, %v1874
    %v1876 = vrot.slane %v1609, %v1875
    %v1877 = vlaneseq
    %v1878 = vshrl.u32 %v1877, 7
    %v1879 = vsub.s32 0, %v1878
    %v1880 = vrot.slane %v1612, %v1879
    %v1881 = vlaneseq
    %v1882 = vshrl.u32 %v1881, 7
    %v1883 = vsub.s32 1, %v1882
    %v1884 = vrot.slane %v1612, %v1883
    %v1885 = vlaneseq
    %v1886 = vshrl.u32 %v1885, 7
    %v1887 = vsub.s32 2, %v1886
    %v1888 = vrot.slane %v1612, %v1887
    %v1889 = vlaneseq
    %v1890 = vshrl.u32 %v1889, 7
    %v1891 = vsub.s32 3, %v1890
    %v1892 = vrot.slane %v1612, %v1891
    %v1893 = vlaneseq
    %v1894 = vshrl.u32 %v1893, 7
    %v1895 = vsub.s32 4, %v1894
    %v1896 = vrot.slane %v1612, %v1895
    %v1897 = vlaneseq
    %v1898 = vshrl.u32 %v1897, 7
    %v1899 = vsub.s32 5, %v1898
    %v1900 = vrot.slane %v1612, %v1899
    %v1901 = vlaneseq
    %v1902 = vshrl.u32 %v1901, 7
    %v1903 = vsub.s32 6, %v1902
    %v1904 = vrot.slane %v1612, %v1903
    %v1905 = vlaneseq
    %v1906 = vshrl.u32 %v1905, 7
    %v1907 = vsub.s32 7, %v1906
    %v1908 = vrot.slane %v1612, %v1907
    %v1909 = vlaneseq
    %v1910 = vshrl.u32 %v1909, 7
    %v1911 = vsub.s32 0, %v1910
    %v1912 = vrot.slane %v1615, %v1911
    %v1913 = vlaneseq
    %v1914 = vshrl.u32 %v1913, 7
    %v1915 = vsub.s32 1, %v1914
    %v1916 = vrot.slane %v1615, %v1915
    %v1917 = vlaneseq
    %v1918 = vshrl.u32 %v1917, 7
    %v1919 = vsub.s32 2, %v1918
    %v1920 = vrot.slane %v1615, %v1919
    %v1921 = vlaneseq
    %v1922 = vshrl.u32 %v1921, 7
    %v1923 = vsub.s32 3, %v1922
    %v1924 = vrot.slane %v1615, %v1923
    %v1925 = vlaneseq
    %v1926 = vshrl.u32 %v1925, 7
    %v1927 = vsub.s32 4, %v1926
    %v1928 = vrot.slane %v1615, %v1927
    %v1929 = vlaneseq
    %v1930 = vshrl.u32 %v1929, 7
    %v1931 = vsub.s32 5, %v1930
    %v1932 = vrot.slane %v1615, %v1931
    %v1933 = vlaneseq
    %v1934 = vshrl.u32 %v1933, 7
    %v1935 = vsub.s32 6, %v1934
    %v1936 = vrot.slane %v1615, %v1935
    %v1937 = vlaneseq
    %v1938 = vshrl.u32 %v1937, 7
    %v1939 = vsub.s32 7, %v1938
    %v1940 = vrot.slane %v1615, %v1939
    %v1941 = vlaneseq
    %v1942 = vshrl.u32 %v1941, 7
    %v1943 = vsub.s32 0, %v1942
    %v1944 = vrot.slane %v1618, %v1943
    %v1945 = vlaneseq
    %v1946 = vshrl.u32 %v1945, 7
    %v1947 = vsub.s32 1, %v1946
    %v1948 = vrot.slane %v1618, %v1947
    %v1949 = vlaneseq
    %v1950 = vshrl.u32 %v1949, 7
    %v1951 = vsub.s32 2, %v1950
    %v1952 = vrot.slane %v1618, %v1951
    %v1953 = vlaneseq
    %v1954 = vshrl.u32 %v1953, 7
    %v1955 = vsub.s32 3, %v1954
    %v1956 = vrot.slane %v1618, %v1955
    %v1957 = vlaneseq
    %v1958 = vshrl.u32 %v1957, 7
    %v1959 = vsub.s32 4, %v1958
    %v1960 = vrot.slane %v1618, %v1959
    %v1961 = vlaneseq
    %v1962 = vshrl.u32 %v1961, 7
    %v1963 = vsub.s32 5, %v1962
    %v1964 = vrot.slane %v1618, %v1963
    %v1965 = vlaneseq
    %v1966 = vshrl.u32 %v1965, 7
    %v1967 = vsub.s32 6, %v1966
    %v1968 = vrot.slane %v1618, %v1967
    %v1969 = vlaneseq
    %v1970 = vshrl.u32 %v1969, 7
    %v1971 = vsub.s32 7, %v1970
    %v1972 = vrot.slane %v1618, %v1971
    %v1973 = vlaneseq
    %v1974 = vshrl.u32 %v1973, 7
    %v1975 = vsub.s32 0, %v1974
    %v1976 = vrot.slane %v1621, %v1975
    %v1977 = vlaneseq
    %v1978 = vshrl.u32 %v1977, 7
    %v1979 = vsub.s32 1, %v1978
    %v1980 = vrot.slane %v1621, %v1979
    %v1981 = vlaneseq
    %v1982 = vshrl.u32 %v1981, 7
    %v1983 = vsub.s32 2, %v1982
    %v1984 = vrot.slane %v1621, %v1983
    %v1985 = vlaneseq
    %v1986 = vshrl.u32 %v1985, 7
    %v1987 = vsub.s32 3, %v1986
    %v1988 = vrot.slane %v1621, %v1987
    %v1989 = vlaneseq
    %v1990 = vshrl.u32 %v1989, 7
    %v1991 = vsub.s32 4, %v1990
    %v1992 = vrot.slane %v1621, %v1991
    %v1993 = vlaneseq
    %v1994 = vshrl.u32 %v1993, 7
    %v1995 = vsub.s32 5, %v1994
    %v1996 = vrot.slane %v1621, %v1995
    %v1997 = vlaneseq
    %v1998 = vshrl.u32 %v1997, 7
    %v1999 = vsub.s32 6, %v1998
    %v2000 = vrot.slane %v1621, %v1999
    %v2001 = vlaneseq
    %v2002 = vshrl.u32 %v2001, 7
    %v2003 = vsub.s32 7, %v2002
    %v2004 = vrot.slane %v1621, %v2003
    %v2005 = vlaneseq
    %v2006 = vshrl.u32 %v2005, 7
    %v2007 = vsub.s32 0, %v2006
    %v2008 = vrot.slane %v1624, %v2007
    %v2009 = vlaneseq
    %v2010 = vshrl.u32 %v2009, 7
    %v2011 = vsub.s32 1, %v2010
    %v2012 = vrot.slane %v1624, %v2011
    %v2013 = vlaneseq
    %v2014 = vshrl.u32 %v2013, 7
    %v2015 = vsub.s32 2, %v2014
    %v2016 = vrot.slane %v1624, %v2015
    %v2017 = vlaneseq
    %v2018 = vshrl.u32 %v2017, 7
    %v2019 = vsub.s32 3, %v2018
    %v2020 = vrot.slane %v1624, %v2019
    %v2021 = vlaneseq
    %v2022 = vshrl.u32 %v2021, 7
    %v2023 = vsub.s32 4, %v2022
    %v2024 = vrot.slane %v1624, %v2023
    %v2025 = vlaneseq
    %v2026 = vshrl.u32 %v2025, 7
    %v2027 = vsub.s32 5, %v2026
    %v2028 = vrot.slane %v1624, %v2027
    %v2029 = vlaneseq
    %v2030 = vshrl.u32 %v2029, 7
    %v2031 = vsub.s32 6, %v2030
    %v2032 = vrot.slane %v1624, %v2031
    %v2033 = vlaneseq
    %v2034 = vshrl.u32 %v2033, 7
    %v2035 = vsub.s32 7, %v2034
    %v2036 = vrot.slane %v1624, %v2035
    %v2037 = vlaneseq
    %v2038 = vshrl.u32 %v2037, 7
    %v2039 = vsub.s32 0, %v2038
    %v2040 = vrot.slane %v1627, %v2039
    %v2041 = vlaneseq
    %v2042 = vshrl.u32 %v2041, 7
    %v2043 = vsub.s32 1, %v2042
    %v2044 = vrot.slane %v1627, %v2043
    %v2045 = vlaneseq
    %v2046 = vshrl.u32 %v2045, 7
    %v2047 = vsub.s32 2, %v2046
    %v2048 = vrot.slane %v1627, %v2047
    %v2049 = vlaneseq
    %v2050 = vshrl.u32 %v2049, 7
    %v2051 = vsub.s32 3, %v2050
    %v2052 = vrot.slane %v1627, %v2051
    %v2053 = vlaneseq
    %v2054 = vshrl.u32 %v2053, 7
    %v2055 = vsub.s32 4, %v2054
    %v2056 = vrot.slane %v1627, %v2055
    %v2057 = vlaneseq
    %v2058 = vshrl.u32 %v2057, 7
    %v2059 = vsub.s32 5, %v2058
    %v2060 = vrot.slane %v1627, %v2059
    %v2061 = vlaneseq
    %v2062 = vshrl.u32 %v2061, 7
    %v2063 = vsub.s32 6, %v2062
    %v2064 = vrot.slane %v1627, %v2063
    %v2065 = vlaneseq
    %v2066 = vshrl.u32 %v2065, 7
    %v2067 = vsub.s32 7, %v2066
    %v2068 = vrot.slane %v1627, %v2067
    %v2069 = vlaneseq
    %v2070 = vshrl.u32 %v2069, 7
    %v2071 = vsub.s32 0, %v2070
    %v2072 = vrot.slane %v1630, %v2071
    %v2073 = vlaneseq
    %v2074 = vshrl.u32 %v2073, 7
    %v2075 = vsub.s32 1, %v2074
    %v2076 = vrot.slane %v1630, %v2075
    %v2077 = vlaneseq
    %v2078 = vshrl.u32 %v2077, 7
    %v2079 = vsub.s32 2, %v2078
    %v2080 = vrot.slane %v1630, %v2079
    %v2081 = vlaneseq
    %v2082 = vshrl.u32 %v2081, 7
    %v2083 = vsub.s32 3, %v2082
    %v2084 = vrot.slane %v1630, %v2083
    %v2085 = vlaneseq
    %v2086 = vshrl.u32 %v2085, 7
    %v2087 = vsub.s32 4, %v2086
    %v2088 = vrot.slane %v1630, %v2087
    %v2089 = vlaneseq
    %v2090 = vshrl.u32 %v2089, 7
    %v2091 = vsub.s32 5, %v2090
    %v2092 = vrot.slane %v1630, %v2091
    %v2093 = vlaneseq
    %v2094 = vshrl.u32 %v2093, 7
    %v2095 = vsub.s32 6, %v2094
    %v2096 = vrot.slane %v1630, %v2095
    %v2097 = vlaneseq
    %v2098 = vshrl.u32 %v2097, 7
    %v2099 = vsub.s32 7, %v2098
    %v2100 = vrot.slane %v1630, %v2099
    %v2101 = vlaneseq
    %v2102 = vshrl.u32 %v2101, 7
    %v2103 = vsub.s32 0, %v2102
    %v2104 = vrot.slane %v1633, %v2103
    %v2105 = vlaneseq
    %v2106 = vshrl.u32 %v2105, 7
    %v2107 = vsub.s32 1, %v2106
    %v2108 = vrot.slane %v1633, %v2107
    %v2109 = vlaneseq
    %v2110 = vshrl.u32 %v2109, 7
    %v2111 = vsub.s32 2, %v2110
    %v2112 = vrot.slane %v1633, %v2111
    %v2113 = vlaneseq
    %v2114 = vshrl.u32 %v2113, 7
    %v2115 = vsub.s32 3, %v2114
    %v2116 = vrot.slane %v1633, %v2115
    %v2117 = vlaneseq
    %v2118 = vshrl.u32 %v2117, 7
    %v2119 = vsub.s32 4, %v2118
    %v2120 = vrot.slane %v1633, %v2119
    %v2121 = vlaneseq
    %v2122 = vshrl.u32 %v2121, 7
    %v2123 = vsub.s32 5, %v2122
    %v2124 = vrot.slane %v1633, %v2123
    %v2125 = vlaneseq
    %v2126 = vshrl.u32 %v2125, 7
    %v2127 = vsub.s32 6, %v2126
    %v2128 = vrot.slane %v1633, %v2127
    %v2129 = vlaneseq
    %v2130 = vshrl.u32 %v2129, 7
    %v2131 = vsub.s32 7, %v2130
    %v2132 = vrot.slane %v1633, %v2131
    %v2133 = vlaneseq
    %v2134 = vshrl.u32 %v2133, 7
    %v2135 = vsub.s32 0, %v2134
    %v2136 = vrot.slane %v1636, %v2135
    %v2137 = vlaneseq
    %v2138 = vshrl.u32 %v2137, 7
    %v2139 = vsub.s32 1, %v2138
    %v2140 = vrot.slane %v1636, %v2139
    %v2141 = vlaneseq
    %v2142 = vshrl.u32 %v2141, 7
    %v2143 = vsub.s32 2, %v2142
    %v2144 = vrot.slane %v1636, %v2143
    %v2145 = vlaneseq
    %v2146 = vshrl.u32 %v2145, 7
    %v2147 = vsub.s32 3, %v2146
    %v2148 = vrot.slane %v1636, %v2147
    %v2149 = vlaneseq
    %v2150 = vshrl.u32 %v2149, 7
    %v2151 = vsub.s32 4, %v2150
    %v2152 = vrot.slane %v1636, %v2151
    %v2153 = vlaneseq
    %v2154 = vshrl.u32 %v2153, 7
    %v2155 = vsub.s32 5, %v2154
    %v2156 = vrot.slane %v1636, %v2155
    %v2157 = vlaneseq
    %v2158 = vshrl.u32 %v2157, 7
    %v2159 = vsub.s32 6, %v2158
    %v2160 = vrot.slane %v1636, %v2159
    %v2161 = vlaneseq
    %v2162 = vshrl.u32 %v2161, 7
    %v2163 = vsub.s32 7, %v2162
    %v2164 = vrot.slane %v1636, %v2163
    %v2165 = vcombine.low %v1656, %v1660
    %v2166 = vcombine.low %v1664, %v1668
    %v2167 = vcombine.low %v1672, %v1676
    %v2168 = vcombine.low %v1680, %v1684
    %v2170 = vunpack.c.l.s4 1966171168
    %v2171 = vunpack.c.0.s8 %v2170
    %v2172 = vlaneseq
    %v2173 = vshrl.u32 %v2172, 7
    %v2174 = vsub.s32 %v2171, %v2173
    %v2175 = vrot.slane %v2165, %v2174
    %v2177 = vunpack.c.l.s4 1966171168
    %v2178 = vunpack.c.0.s8 %v2177
    %v2179 = vlaneseq
    %v2180 = vshrl.u32 %v2179, 7
    %v2181 = vsub.s32 %v2178, %v2180
    %v2182 = vrot.slane %v2166, %v2181
    %v2184 = vunpack.c.l.s4 1966171168
    %v2185 = vunpack.c.0.s8 %v2184
    %v2186 = vlaneseq
    %v2187 = vshrl.u32 %v2186, 7
    %v2188 = vsub.s32 %v2185, %v2187
    %v2189 = vrot.slane %v2167, %v2188
    %v2191 = vunpack.c.l.s4 1966171168
    %v2192 = vunpack.c.0.s8 %v2191
    %v2193 = vlaneseq
    %v2194 = vshrl.u32 %v2193, 7
    %v2195 = vsub.s32 %v2192, %v2194
    %v2196 = vrot.slane %v2168, %v2195
    %v2197 = vcombine.low %v2175, %v2182
    %v2198 = vcombine.low %v2189, %v2196
    %v2200 = vunpack.c.l.s4 1966171168
    %v2201 = vunpack.c.0.s8 %v2200
    %v2202 = vlaneseq
    %v2203 = vshrl.u32 %v2202, 7
    %v2204 = vsub.s32 %v2201, %v2203
    %v2205 = vrot.slane %v2197, %v2204
    %v2207 = vunpack.c.l.s4 1966171168
    %v2208 = vunpack.c.0.s8 %v2207
    %v2209 = vlaneseq
    %v2210 = vshrl.u32 %v2209, 7
    %v2211 = vsub.s32 %v2208, %v2210
    %v2212 = vrot.slane %v2198, %v2211
    %v2213 = vcombine.low %v2205, %v2212
    %v2214 = vcombine.low %v1688, %v1692
    %v2215 = vcombine.low %v1696, %v1700
    %v2216 = vcombine.low %v1704, %v1708
    %v2217 = vcombine.low %v1712, %v1716
    %v2219 = vunpack.c.l.s4 1966171168
    %v2220 = vunpack.c.0.s8 %v2219
    %v2221 = vlaneseq
    %v2222 = vshrl.u32 %v2221, 7
    %v2223 = vsub.s32 %v2220, %v2222
    %v2224 = vrot.slane %v2214, %v2223
    %v2226 = vunpack.c.l.s4 1966171168
    %v2227 = vunpack.c.0.s8 %v2226
    %v2228 = vlaneseq
    %v2229 = vshrl.u32 %v2228, 7
    %v2230 = vsub.s32 %v2227, %v2229
    %v2231 = vrot.slane %v2215, %v2230
    %v2233 = vunpack.c.l.s4 1966171168
    %v2234 = vunpack.c.0.s8 %v2233
    %v2235 = vlaneseq
    %v2236 = vshrl.u32 %v2235, 7
    %v2237 = vsub.s32 %v2234, %v2236
    %v2238 = vrot.slane %v2216, %v2237
    %v2240 = vunpack.c.l.s4 1966171168
    %v2241 = vunpack.c.0.s8 %v2240
    %v2242 = vlaneseq
    %v2243 = vshrl.u32 %v2242, 7
    %v2244 = vsub.s32 %v2241, %v2243
    %v2245 = vrot.slane %v2217, %v2244
    %v2246 = vcombine.low %v2224, %v2231
    %v2247 = vcombine.low %v2238, %v2245
    %v2249 = vunpack.c.l.s4 1966171168
    %v2250 = vunpack.c.0.s8 %v2249
    %v2251 = vlaneseq
    %v2252 = vshrl.u32 %v2251, 7
    %v2253 = vsub.s32 %v2250, %v2252
    %v2254 = vrot.slane %v2246, %v2253
    %v2256 = vunpack.c.l.s4 1966171168
    %v2257 = vunpack.c.0.s8 %v2256
    %v2258 = vlaneseq
    %v2259 = vshrl.u32 %v2258, 7
    %v2260 = vsub.s32 %v2257, %v2259
    %v2261 = vrot.slane %v2247, %v2260
    %v2262 = vcombine.low %v2254, %v2261
    %v2263 = vcombine.low %v1720, %v1724
    %v2264 = vcombine.low %v1728, %v1732
    %v2265 = vcombine.low %v1736, %v1740
    %v2266 = vcombine.low %v1744, %v1748
    %v2268 = vunpack.c.l.s4 1966171168
    %v2269 = vunpack.c.0.s8 %v2268
    %v2270 = vlaneseq
    %v2271 = vshrl.u32 %v2270, 7
    %v2272 = vsub.s32 %v2269, %v2271
    %v2273 = vrot.slane %v2263, %v2272
    %v2275 = vunpack.c.l.s4 1966171168
    %v2276 = vunpack.c.0.s8 %v2275
    %v2277 = vlaneseq
    %v2278 = vshrl.u32 %v2277, 7
    %v2279 = vsub.s32 %v2276, %v2278
    %v2280 = vrot.slane %v2264, %v2279
    %v2282 = vunpack.c.l.s4 1966171168
    %v2283 = vunpack.c.0.s8 %v2282
    %v2284 = vlaneseq
    %v2285 = vshrl.u32 %v2284, 7
    %v2286 = vsub.s32 %v2283, %v2285
    %v2287 = vrot.slane %v2265, %v2286
    %v2289 = vunpack.c.l.s4 1966171168
    %v2290 = vunpack.c.0.s8 %v2289
    %v2291 = vlaneseq
    %v2292 = vshrl.u32 %v2291, 7
    %v2293 = vsub.s32 %v2290, %v2292
    %v2294 = vrot.slane %v2266, %v2293
    %v2295 = vcombine.low %v2273, %v2280
    %v2296 = vcombine.low %v2287, %v2294
    %v2298 = vunpack.c.l.s4 1966171168
    %v2299 = vunpack.c.0.s8 %v2298
    %v2300 = vlaneseq
    %v2301 = vshrl.u32 %v2300, 7
    %v2302 = vsub.s32 %v2299, %v2301
    %v2303 = vrot.slane %v2295, %v2302
    %v2305 = vunpack.c.l.s4 1966171168
    %v2306 = vunpack.c.0.s8 %v2305
    %v2307 = vlaneseq
    %v2308 = vshrl.u32 %v2307, 7
    %v2309 = vsub.s32 %v2306, %v2308
    %v2310 = vrot.slane %v2296, %v2309
    %v2311 = vcombine.low %v2303, %v2310
    %v2312 = vcombine.low %v1752, %v1756
    %v2313 = vcombine.low %v1760, %v1764
    %v2314 = vcombine.low %v1768, %v1772
    %v2315 = vcombine.low %v1776, %v1780
    %v2317 = vunpack.c.l.s4 1966171168
    %v2318 = vunpack.c.0.s8 %v2317
    %v2319 = vlaneseq
    %v2320 = vshrl.u32 %v2319, 7
    %v2321 = vsub.s32 %v2318, %v2320
    %v2322 = vrot.slane %v2312, %v2321
    %v2324 = vunpack.c.l.s4 1966171168
    %v2325 = vunpack.c.0.s8 %v2324
    %v2326 = vlaneseq
    %v2327 = vshrl.u32 %v2326, 7
    %v2328 = vsub.s32 %v2325, %v2327
    %v2329 = vrot.slane %v2313, %v2328
    %v2331 = vunpack.c.l.s4 1966171168
    %v2332 = vunpack.c.0.s8 %v2331
    %v2333 = vlaneseq
    %v2334 = vshrl.u32 %v2333, 7
    %v2335 = vsub.s32 %v2332, %v2334
    %v2336 = vrot.slane %v2314, %v2335
    %v2338 = vunpack.c.l.s4 1966171168
    %v2339 = vunpack.c.0.s8 %v2338
    %v2340 = vlaneseq
    %v2341 = vshrl.u32 %v2340, 7
    %v2342 = vsub.s32 %v2339, %v2341
    %v2343 = vrot.slane %v2315, %v2342
    %v2344 = vcombine.low %v2322, %v2329
    %v2345 = vcombine.low %v2336, %v2343
    %v2347 = vunpack.c.l.s4 1966171168
    %v2348 = vunpack.c.0.s8 %v2347
    %v2349 = vlaneseq
    %v2350 = vshrl.u32 %v2349, 7
    %v2351 = vsub.s32 %v2348, %v2350
    %v2352 = vrot.slane %v2344, %v2351
    %v2354 = vunpack.c.l.s4 1966171168
    %v2355 = vunpack.c.0.s8 %v2354
    %v2356 = vlaneseq
    %v2357 = vshrl.u32 %v2356, 7
    %v2358 = vsub.s32 %v2355, %v2357
    %v2359 = vrot.slane %v2345, %v2358
    %v2360 = vcombine.low %v2352, %v2359
    %v2361 = vcombine.low %v1784, %v1788
    %v2362 = vcombine.low %v1792, %v1796
    %v2363 = vcombine.low %v1800, %v1804
    %v2364 = vcombine.low %v1808, %v1812
    %v2366 = vunpack.c.l.s4 1966171168
    %v2367 = vunpack.c.0.s8 %v2366
    %v2368 = vlaneseq
    %v2369 = vshrl.u32 %v2368, 7
    %v2370 = vsub.s32 %v2367, %v2369
    %v2371 = vrot.slane %v2361, %v2370
    %v2373 = vunpack.c.l.s4 1966171168
    %v2374 = vunpack.c.0.s8 %v2373
    %v2375 = vlaneseq
    %v2376 = vshrl.u32 %v2375, 7
    %v2377 = vsub.s32 %v2374, %v2376
    %v2378 = vrot.slane %v2362, %v2377
    %v2380 = vunpack.c.l.s4 1966171168
    %v2381 = vunpack.c.0.s8 %v2380
    %v2382 = vlaneseq
    %v2383 = vshrl.u32 %v2382, 7
    %v2384 = vsub.s32 %v2381, %v2383
    %v2385 = vrot.slane %v2363, %v2384
    %v2387 = vunpack.c.l.s4 1966171168
    %v2388 = vunpack.c.0.s8 %v2387
    %v2389 = vlaneseq
    %v2390 = vshrl.u32 %v2389, 7
    %v2391 = vsub.s32 %v2388, %v2390
    %v2392 = vrot.slane %v2364, %v2391
    %v2393 = vcombine.low %v2371, %v2378
    %v2394 = vcombine.low %v2385, %v2392
    %v2396 = vunpack.c.l.s4 1966171168
    %v2397 = vunpack.c.0.s8 %v2396
    %v2398 = vlaneseq
    %v2399 = vshrl.u32 %v2398, 7
    %v2400 = vsub.s32 %v2397, %v2399
    %v2401 = vrot.slane %v2393, %v2400
    %v2403 = vunpack.c.l.s4 1966171168
    %v2404 = vunpack.c.0.s8 %v2403
    %v2405 = vlaneseq
    %v2406 = vshrl.u32 %v2405, 7
    %v2407 = vsub.s32 %v2404, %v2406
    %v2408 = vrot.slane %v2394, %v2407
    %v2409 = vcombine.low %v2401, %v2408
    %v2410 = vcombine.low %v1816, %v1820
    %v2411 = vcombine.low %v1824, %v1828
    %v2412 = vcombine.low %v1832, %v1836
    %v2413 = vcombine.low %v1840, %v1844
    %v2415 = vunpack.c.l.s4 1966171168
    %v2416 = vunpack.c.0.s8 %v2415
    %v2417 = vlaneseq
    %v2418 = vshrl.u32 %v2417, 7
    %v2419 = vsub.s32 %v2416, %v2418
    %v2420 = vrot.slane %v2410, %v2419
    %v2422 = vunpack.c.l.s4 1966171168
    %v2423 = vunpack.c.0.s8 %v2422
    %v2424 = vlaneseq
    %v2425 = vshrl.u32 %v2424, 7
    %v2426 = vsub.s32 %v2423, %v2425
    %v2427 = vrot.slane %v2411, %v2426
    %v2429 = vunpack.c.l.s4 1966171168
    %v2430 = vunpack.c.0.s8 %v2429
    %v2431 = vlaneseq
    %v2432 = vshrl.u32 %v2431, 7
    %v2433 = vsub.s32 %v2430, %v2432
    %v2434 = vrot.slane %v2412, %v2433
    %v2436 = vunpack.c.l.s4 1966171168
    %v2437 = vunpack.c.0.s8 %v2436
    %v2438 = vlaneseq
    %v2439 = vshrl.u32 %v2438, 7
    %v2440 = vsub.s32 %v2437, %v2439
    %v2441 = vrot.slane %v2413, %v2440
    %v2442 = vcombine.low %v2420, %v2427
    %v2443 = vcombine.low %v2434, %v2441
    %v2445 = vunpack.c.l.s4 1966171168
    %v2446 = vunpack.c.0.s8 %v2445
    %v2447 = vlaneseq
    %v2448 = vshrl.u32 %v2447, 7
    %v2449 = vsub.s32 %v2446, %v2448
    %v2450 = vrot.slane %v2442, %v2449
    %v2452 = vunpack.c.l.s4 1966171168
    %v2453 = vunpack.c.0.s8 %v2452
    %v2454 = vlaneseq
    %v2455 = vshrl.u32 %v2454, 7
    %v2456 = vsub.s32 %v2453, %v2455
    %v2457 = vrot.slane %v2443, %v2456
    %v2458 = vcombine.low %v2450, %v2457
    %v2459 = vcombine.low %v1848, %v1852
    %v2460 = vcombine.low %v1856, %v1860
    %v2461 = vcombine.low %v1864, %v1868
    %v2462 = vcombine.low %v1872, %v1876
    %v2464 = vunpack.c.l.s4 1966171168
    %v2465 = vunpack.c.0.s8 %v2464
    %v2466 = vlaneseq
    %v2467 = vshrl.u32 %v2466, 7
    %v2468 = vsub.s32 %v2465, %v2467
    %v2469 = vrot.slane %v2459, %v2468
    %v2471 = vunpack.c.l.s4 1966171168
    %v2472 = vunpack.c.0.s8 %v2471
    %v2473 = vlaneseq
    %v2474 = vshrl.u32 %v2473, 7
    %v2475 = vsub.s32 %v2472, %v2474
    %v2476 = vrot.slane %v2460, %v2475
    %v2478 = vunpack.c.l.s4 1966171168
    %v2479 = vunpack.c.0.s8 %v2478
    %v2480 = vlaneseq
    %v2481 = vshrl.u32 %v2480, 7
    %v2482 = vsub.s32 %v2479, %v2481
    %v2483 = vrot.slane %v2461, %v2482
    %v2485 = vunpack.c.l.s4 1966171168
    %v2486 = vunpack.c.0.s8 %v2485
    %v2487 = vlaneseq
    %v2488 = vshrl.u32 %v2487, 7
    %v2489 = vsub.s32 %v2486, %v2488
    %v2490 = vrot.slane %v2462, %v2489
    %v2491 = vcombine.low %v2469, %v2476
    %v2492 = vcombine.low %v2483, %v2490
    %v2494 = vunpack.c.l.s4 1966171168
    %v2495 = vunpack.c.0.s8 %v2494
    %v2496 = vlaneseq
    %v2497 = vshrl.u32 %v2496, 7
    %v2498 = vsub.s32 %v2495, %v2497
    %v2499 = vrot.slane %v2491, %v2498
    %v2501 = vunpack.c.l.s4 1966171168
    %v2502 = vunpack.c.0.s8 %v2501
    %v2503 = vlaneseq
    %v2504 = vshrl.u32 %v2503, 7
    %v2505 = vsub.s32 %v2502, %v2504
    %v2506 = vrot.slane %v2492, %v2505
    %v2507 = vcombine.low %v2499, %v2506
    %v2508 = vcombine.low %v1880, %v1884
    %v2509 = vcombine.low %v1888, %v1892
    %v2510 = vcombine.low %v1896, %v1900
    %v2511 = vcombine.low %v1904, %v1908
    %v2513 = vunpack.c.l.s4 1966171168
    %v2514 = vunpack.c.0.s8 %v2513
    %v2515 = vlaneseq
    %v2516 = vshrl.u32 %v2515, 7
    %v2517 = vsub.s32 %v2514, %v2516
    %v2518 = vrot.slane %v2508, %v2517
    %v2520 = vunpack.c.l.s4 1966171168
    %v2521 = vunpack.c.0.s8 %v2520
    %v2522 = vlaneseq
    %v2523 = vshrl.u32 %v2522, 7
    %v2524 = vsub.s32 %v2521, %v2523
    %v2525 = vrot.slane %v2509, %v2524
    %v2527 = vunpack.c.l.s4 1966171168
    %v2528 = vunpack.c.0.s8 %v2527
    %v2529 = vlaneseq
    %v2530 = vshrl.u32 %v2529, 7
    %v2531 = vsub.s32 %v2528, %v2530
    %v2532 = vrot.slane %v2510, %v2531
    %v2534 = vunpack.c.l.s4 1966171168
    %v2535 = vunpack.c.0.s8 %v2534
    %v2536 = vlaneseq
    %v2537 = vshrl.u32 %v2536, 7
    %v2538 = vsub.s32 %v2535, %v2537
    %v2539 = vrot.slane %v2511, %v2538
    %v2540 = vcombine.low %v2518, %v2525
    %v2541 = vcombine.low %v2532, %v2539
    %v2543 = vunpack.c.l.s4 1966171168
    %v2544 = vunpack.c.0.s8 %v2543
    %v2545 = vlaneseq
    %v2546 = vshrl.u32 %v2545, 7
    %v2547 = vsub.s32 %v2544, %v2546
    %v2548 = vrot.slane %v2540, %v2547
    %v2550 = vunpack.c.l.s4 1966171168
    %v2551 = vunpack.c.0.s8 %v2550
    %v2552 = vlaneseq
    %v2553 = vshrl.u32 %v2552, 7
    %v2554 = vsub.s32 %v2551, %v2553
    %v2555 = vrot.slane %v2541, %v2554
    %v2556 = vcombine.low %v2548, %v2555
    %v2557 = vcombine.low %v1912, %v1916
    %v2558 = vcombine.low %v1920, %v1924
    %v2559 = vcombine.low %v1928, %v1932
    %v2560 = vcombine.low %v1936, %v1940
    %v2562 = vunpack.c.l.s4 1966171168
    %v2563 = vunpack.c.0.s8 %v2562
    %v2564 = vlaneseq
    %v2565 = vshrl.u32 %v2564, 7
    %v2566 = vsub.s32 %v2563, %v2565
    %v2567 = vrot.slane %v2557, %v2566
    %v2569 = vunpack.c.l.s4 1966171168
    %v2570 = vunpack.c.0.s8 %v2569
    %v2571 = vlaneseq
    %v2572 = vshrl.u32 %v2571, 7
    %v2573 = vsub.s32 %v2570, %v2572
    %v2574 = vrot.slane %v2558, %v2573
    %v2576 = vunpack.c.l.s4 1966171168
    %v2577 = vunpack.c.0.s8 %v2576
    %v2578 = vlaneseq
    %v2579 = vshrl.u32 %v2578, 7
    %v2580 = vsub.s32 %v2577, %v2579
    %v2581 = vrot.slane %v2559, %v2580
    %v2583 = vunpack.c.l.s4 1966171168
    %v2584 = vunpack.c.0.s8 %v2583
    %v2585 = vlaneseq
    %v2586 = vshrl.u32 %v2585, 7
    %v2587 = vsub.s32 %v2584, %v2586
    %v2588 = vrot.slane %v2560, %v2587
    %v2589 = vcombine.low %v2567, %v2574
    %v2590 = vcombine.low %v2581, %v2588
    %v2592 = vunpack.c.l.s4 1966171168
    %v2593 = vunpack.c.0.s8 %v2592
    %v2594 = vlaneseq
    %v2595 = vshrl.u32 %v2594, 7
    %v2596 = vsub.s32 %v2593, %v2595
    %v2597 = vrot.slane %v2589, %v2596
    %v2599 = vunpack.c.l.s4 1966171168
    %v2600 = vunpack.c.0.s8 %v2599
    %v2601 = vlaneseq
    %v2602 = vshrl.u32 %v2601, 7
    %v2603 = vsub.s32 %v2600, %v2602
    %v2604 = vrot.slane %v2590, %v2603
    %v2605 = vcombine.low %v2597, %v2604
    %v2606 = vcombine.low %v1944, %v1948
    %v2607 = vcombine.low %v1952, %v1956
    %v2608 = vcombine.low %v1960, %v1964
    %v2609 = vcombine.low %v1968, %v1972
    %v2611 = vunpack.c.l.s4 1966171168
    %v2612 = vunpack.c.0.s8 %v2611
    %v2613 = vlaneseq
    %v2614 = vshrl.u32 %v2613, 7
    %v2615 = vsub.s32 %v2612, %v2614
    %v2616 = vrot.slane %v2606, %v2615
    %v2618 = vunpack.c.l.s4 1966171168
    %v2619 = vunpack.c.0.s8 %v2618
    %v2620 = vlaneseq
    %v2621 = vshrl.u32 %v2620, 7
    %v2622 = vsub.s32 %v2619, %v2621
    %v2623 = vrot.slane %v2607, %v2622
    %v2625 = vunpack.c.l.s4 1966171168
    %v2626 = vunpack.c.0.s8 %v2625
    %v2627 = vlaneseq
    %v2628 = vshrl.u32 %v2627, 7
    %v2629 = vsub.s32 %v2626, %v2628
    %v2630 = vrot.slane %v2608, %v2629
    %v2632 = vunpack.c.l.s4 1966171168
    %v2633 = vunpack.c.0.s8 %v2632
    %v2634 = vlaneseq
    %v2635 = vshrl.u32 %v2634, 7
    %v2636 = vsub.s32 %v2633, %v2635
    %v2637 = vrot.slane %v2609, %v2636
    %v2638 = vcombine.low %v2616, %v2623
    %v2639 = vcombine.low %v2630, %v2637
    %v2641 = vunpack.c.l.s4 1966171168
    %v2642 = vunpack.c.0.s8 %v2641
    %v2643 = vlaneseq
    %v2644 = vshrl.u32 %v2643, 7
    %v2645 = vsub.s32 %v2642, %v2644
    %v2646 = vrot.slane %v2638, %v2645
    %v2648 = vunpack.c.l.s4 1966171168
    %v2649 = vunpack.c.0.s8 %v2648
    %v2650 = vlaneseq
    %v2651 = vshrl.u32 %v2650, 7
    %v2652 = vsub.s32 %v2649, %v2651
    %v2653 = vrot.slane %v2639, %v2652
    %v2654 = vcombine.low %v2646, %v2653
    %v2655 = vcombine.low %v1976, %v1980
    %v2656 = vcombine.low %v1984, %v1988
    %v2657 = vcombine.low %v1992, %v1996
    %v2658 = vcombine.low %v2000, %v2004
    %v2660 = vunpack.c.l.s4 1966171168
    %v2661 = vunpack.c.0.s8 %v2660
    %v2662 = vlaneseq
    %v2663 = vshrl.u32 %v2662, 7
    %v2664 = vsub.s32 %v2661, %v2663
    %v2665 = vrot.slane %v2655, %v2664
    %v2667 = vunpack.c.l.s4 1966171168
    %v2668 = vunpack.c.0.s8 %v2667
    %v2669 = vlaneseq
    %v2670 = vshrl.u32 %v2669, 7
    %v2671 = vsub.s32 %v2668, %v2670
    %v2672 = vrot.slane %v2656, %v2671
    %v2674 = vunpack.c.l.s4 1966171168
    %v2675 = vunpack.c.0.s8 %v2674
    %v2676 = vlaneseq
    %v2677 = vshrl.u32 %v2676, 7
    %v2678 = vsub.s32 %v2675, %v2677
    %v2679 = vrot.slane %v2657, %v2678
    %v2681 = vunpack.c.l.s4 1966171168
    %v2682 = vunpack.c.0.s8 %v2681
    %v2683 = vlaneseq
    %v2684 = vshrl.u32 %v2683, 7
    %v2685 = vsub.s32 %v2682, %v2684
    %v2686 = vrot.slane %v2658, %v2685
    %v2687 = vcombine.low %v2665, %v2672
    %v2688 = vcombine.low %v2679, %v2686
    %v2690 = vunpack.c.l.s4 1966171168
    %v2691 = vunpack.c.0.s8 %v2690
    %v2692 = vlaneseq
    %v2693 = vshrl.u32 %v2692, 7
    %v2694 = vsub.s32 %v2691, %v2693
    %v2695 = vrot.slane %v2687, %v2694
    %v2697 = vunpack.c.l.s4 1966171168
    %v2698 = vunpack.c.0.s8 %v2697
    %v2699 = vlaneseq
    %v2700 = vshrl.u32 %v2699, 7
    %v2701 = vsub.s32 %v2698, %v2700
    %v2702 = vrot.slane %v2688, %v2701
    %v2703 = vcombine.low %v2695, %v2702
    %v2704 = vcombine.low %v2008, %v2012
    %v2705 = vcombine.low %v2016, %v2020
    %v2706 = vcombine.low %v2024, %v2028
    %v2707 = vcombine.low %v2032, %v2036
    %v2709 = vunpack.c.l.s4 1966171168
    %v2710 = vunpack.c.0.s8 %v2709
    %v2711 = vlaneseq
    %v2712 = vshrl.u32 %v2711, 7
    %v2713 = vsub.s32 %v2710, %v2712
    %v2714 = vrot.slane %v2704, %v2713
    %v2716 = vunpack.c.l.s4 1966171168
    %v2717 = vunpack.c.0.s8 %v2716
    %v2718 = vlaneseq
    %v2719 = vshrl.u32 %v2718, 7
    %v2720 = vsub.s32 %v2717, %v2719
    %v2721 = vrot.slane %v2705, %v2720
    %v2723 = vunpack.c.l.s4 1966171168
    %v2724 = vunpack.c.0.s8 %v2723
    %v2725 = vlaneseq
    %v2726 = vshrl.u32 %v2725, 7
    %v2727 = vsub.s32 %v2724, %v2726
    %v2728 = vrot.slane %v2706, %v2727
    %v2730 = vunpack.c.l.s4 1966171168
    %v2731 = vunpack.c.0.s8 %v2730
    %v2732 = vlaneseq
    %v2733 = vshrl.u32 %v2732, 7
    %v2734 = vsub.s32 %v2731, %v2733
    %v2735 = vrot.slane %v2707, %v2734
    %v2736 = vcombine.low %v2714, %v2721
    %v2737 = vcombine.low %v2728, %v2735
    %v2739 = vunpack.c.l.s4 1966171168
    %v2740 = vunpack.c.0.s8 %v2739
    %v2741 = vlaneseq
    %v2742 = vshrl.u32 %v2741, 7
    %v2743 = vsub.s32 %v2740, %v2742
    %v2744 = vrot.slane %v2736, %v2743
    %v2746 = vunpack.c.l.s4 1966171168
    %v2747 = vunpack.c.0.s8 %v2746
    %v2748 = vlaneseq
    %v2749 = vshrl.u32 %v2748, 7
    %v2750 = vsub.s32 %v2747, %v2749
    %v2751 = vrot.slane %v2737, %v2750
    %v2752 = vcombine.low %v2744, %v2751
    %v2753 = vcombine.low %v2040, %v2044
    %v2754 = vcombine.low %v2048, %v2052
    %v2755 = vcombine.low %v2056, %v2060
    %v2756 = vcombine.low %v2064, %v2068
    %v2758 = vunpack.c.l.s4 1966171168
    %v2759 = vunpack.c.0.s8 %v2758
    %v2760 = vlaneseq
    %v2761 = vshrl.u32 %v2760, 7
    %v2762 = vsub.s32 %v2759, %v2761
    %v2763 = vrot.slane %v2753, %v2762
    %v2765 = vunpack.c.l.s4 1966171168
    %v2766 = vunpack.c.0.s8 %v2765
    %v2767 = vlaneseq
    %v2768 = vshrl.u32 %v2767, 7
    %v2769 = vsub.s32 %v2766, %v2768
    %v2770 = vrot.slane %v2754, %v2769
    %v2772 = vunpack.c.l.s4 1966171168
    %v2773 = vunpack.c.0.s8 %v2772
    %v2774 = vlaneseq
    %v2775 = vshrl.u32 %v2774, 7
    %v2776 = vsub.s32 %v2773, %v2775
    %v2777 = vrot.slane %v2755, %v2776
    %v2779 = vunpack.c.l.s4 1966171168
    %v2780 = vunpack.c.0.s8 %v2779
    %v2781 = vlaneseq
    %v2782 = vshrl.u32 %v2781, 7
    %v2783 = vsub.s32 %v2780, %v2782
    %v2784 = vrot.slane %v2756, %v2783
    %v2785 = vcombine.low %v2763, %v2770
    %v2786 = vcombine.low %v2777, %v2784
    %v2788 = vunpack.c.l.s4 1966171168
    %v2789 = vunpack.c.0.s8 %v2788
    %v2790 = vlaneseq
    %v2791 = vshrl.u32 %v2790, 7
    %v2792 = vsub.s32 %v2789, %v2791
    %v2793 = vrot.slane %v2785, %v2792
    %v2795 = vunpack.c.l.s4 1966171168
    %v2796 = vunpack.c.0.s8 %v2795
    %v2797 = vlaneseq
    %v2798 = vshrl.u32 %v2797, 7
    %v2799 = vsub.s32 %v2796, %v2798
    %v2800 = vrot.slane %v2786, %v2799
    %v2801 = vcombine.low %v2793, %v2800
    %v2802 = vcombine.low %v2072, %v2076
    %v2803 = vcombine.low %v2080, %v2084
    %v2804 = vcombine.low %v2088, %v2092
    %v2805 = vcombine.low %v2096, %v2100
    %v2807 = vunpack.c.l.s4 1966171168
    %v2808 = vunpack.c.0.s8 %v2807
    %v2809 = vlaneseq
    %v2810 = vshrl.u32 %v2809, 7
    %v2811 = vsub.s32 %v2808, %v2810
    %v2812 = vrot.slane %v2802, %v2811
    %v2814 = vunpack.c.l.s4 1966171168
    %v2815 = vunpack.c.0.s8 %v2814
    %v2816 = vlaneseq
    %v2817 = vshrl.u32 %v2816, 7
    %v2818 = vsub.s32 %v2815, %v2817
    %v2819 = vrot.slane %v2803, %v2818
    %v2821 = vunpack.c.l.s4 1966171168
    %v2822 = vunpack.c.0.s8 %v2821
    %v2823 = vlaneseq
    %v2824 = vshrl.u32 %v2823, 7
    %v2825 = vsub.s32 %v2822, %v2824
    %v2826 = vrot.slane %v2804, %v2825
    %v2828 = vunpack.c.l.s4 1966171168
    %v2829 = vunpack.c.0.s8 %v2828
    %v2830 = vlaneseq
    %v2831 = vshrl.u32 %v2830, 7
    %v2832 = vsub.s32 %v2829, %v2831
    %v2833 = vrot.slane %v2805, %v2832
    %v2834 = vcombine.low %v2812, %v2819
    %v2835 = vcombine.low %v2826, %v2833
    %v2837 = vunpack.c.l.s4 1966171168
    %v2838 = vunpack.c.0.s8 %v2837
    %v2839 = vlaneseq
    %v2840 = vshrl.u32 %v2839, 7
    %v2841 = vsub.s32 %v2838, %v2840
    %v2842 = vrot.slane %v2834, %v2841
    %v2844 = vunpack.c.l.s4 1966171168
    %v2845 = vunpack.c.0.s8 %v2844
    %v2846 = vlaneseq
    %v2847 = vshrl.u32 %v2846, 7
    %v2848 = vsub.s32 %v2845, %v2847
    %v2849 = vrot.slane %v2835, %v2848
    %v2850 = vcombine.low %v2842, %v2849
    %v2851 = vcombine.low %v2104, %v2108
    %v2852 = vcombine.low %v2112, %v2116
    %v2853 = vcombine.low %v2120, %v2124
    %v2854 = vcombine.low %v2128, %v2132
    %v2856 = vunpack.c.l.s4 1966171168
    %v2857 = vunpack.c.0.s8 %v2856
    %v2858 = vlaneseq
    %v2859 = vshrl.u32 %v2858, 7
    %v2860 = vsub.s32 %v2857, %v2859
    %v2861 = vrot.slane %v2851, %v2860
    %v2863 = vunpack.c.l.s4 1966171168
    %v2864 = vunpack.c.0.s8 %v2863
    %v2865 = vlaneseq
    %v2866 = vshrl.u32 %v2865, 7
    %v2867 = vsub.s32 %v2864, %v2866
    %v2868 = vrot.slane %v2852, %v2867
    %v2870 = vunpack.c.l.s4 1966171168
    %v2871 = vunpack.c.0.s8 %v2870
    %v2872 = vlaneseq
    %v2873 = vshrl.u32 %v2872, 7
    %v2874 = vsub.s32 %v2871, %v2873
    %v2875 = vrot.slane %v2853, %v2874
    %v2877 = vunpack.c.l.s4 1966171168
    %v2878 = vunpack.c.0.s8 %v2877
    %v2879 = vlaneseq
    %v2880 = vshrl.u32 %v2879, 7
    %v2881 = vsub.s32 %v2878, %v2880
    %v2882 = vrot.slane %v2854, %v2881
    %v2883 = vcombine.low %v2861, %v2868
    %v2884 = vcombine.low %v2875, %v2882
    %v2886 = vunpack.c.l.s4 1966171168
    %v2887 = vunpack.c.0.s8 %v2886
    %v2888 = vlaneseq
    %v2889 = vshrl.u32 %v2888, 7
    %v2890 = vsub.s32 %v2887, %v2889
    %v2891 = vrot.slane %v2883, %v2890
    %v2893 = vunpack.c.l.s4 1966171168
    %v2894 = vunpack.c.0.s8 %v2893
    %v2895 = vlaneseq
    %v2896 = vshrl.u32 %v2895, 7
    %v2897 = vsub.s32 %v2894, %v2896
    %v2898 = vrot.slane %v2884, %v2897
    %v2899 = vcombine.low %v2891, %v2898
    %v2900 = vcombine.low %v2136, %v2140
    %v2901 = vcombine.low %v2144, %v2148
    %v2902 = vcombine.low %v2152, %v2156
    %v2903 = vcombine.low %v2160, %v2164
    %v2905 = vunpack.c.l.s4 1966171168
    %v2906 = vunpack.c.0.s8 %v2905
    %v2907 = vlaneseq
    %v2908 = vshrl.u32 %v2907, 7
    %v2909 = vsub.s32 %v2906, %v2908
    %v2910 = vrot.slane %v2900, %v2909
    %v2912 = vunpack.c.l.s4 1966171168
    %v2913 = vunpack.c.0.s8 %v2912
    %v2914 = vlaneseq
    %v2915 = vshrl.u32 %v2914, 7
    %v2916 = vsub.s32 %v2913, %v2915
    %v2917 = vrot.slane %v2901, %v2916
    %v2919 = vunpack.c.l.s4 1966171168
    %v2920 = vunpack.c.0.s8 %v2919
    %v2921 = vlaneseq
    %v2922 = vshrl.u32 %v2921, 7
    %v2923 = vsub.s32 %v2920, %v2922
    %v2924 = vrot.slane %v2902, %v2923
    %v2926 = vunpack.c.l.s4 1966171168
    %v2927 = vunpack.c.0.s8 %v2926
    %v2928 = vlaneseq
    %v2929 = vshrl.u32 %v2928, 7
    %v2930 = vsub.s32 %v2927, %v2929
    %v2931 = vrot.slane %v2903, %v2930
    %v2932 = vcombine.low %v2910, %v2917
    %v2933 = vcombine.low %v2924, %v2931
    %v2935 = vunpack.c.l.s4 1966171168
    %v2936 = vunpack.c.0.s8 %v2935
    %v2937 = vlaneseq
    %v2938 = vshrl.u32 %v2937, 7
    %v2939 = vsub.s32 %v2936, %v2938
    %v2940 = vrot.slane %v2932, %v2939
    %v2942 = vunpack.c.l.s4 1966171168
    %v2943 = vunpack.c.0.s8 %v2942
    %v2944 = vlaneseq
    %v2945 = vshrl.u32 %v2944, 7
    %v2946 = vsub.s32 %v2943, %v2945
    %v2947 = vrot.slane %v2933, %v2946
    %v2948 = vcombine.low %v2940, %v2947
    %2949 = vset.pattern.permute.xlu0 0
    %2950 = vperm.xlu0 %2949, %v2213
    %v2951 = vpop.permute.xlu0 %2950
    %2952 = vset.pattern.permute.xlu0 0
    %2953 = vperm.xlu0 %2952, %v2262
    %v2954 = vpop.permute.xlu0 %2953
    %2955 = vset.pattern.permute.xlu0 0
    %2956 = vperm.xlu0 %2955, %v2311
    %v2957 = vpop.permute.xlu0 %2956
    %2958 = vset.pattern.permute.xlu0 0
    %2959 = vperm.xlu0 %2958, %v2360
    %v2960 = vpop.permute.xlu0 %2959
    %2961 = vset.pattern.permute.xlu0 0
    %2962 = vperm.xlu0 %2961, %v2409
    %v2963 = vpop.permute.xlu0 %2962
    %2964 = vset.pattern.permute.xlu0 0
    %2965 = vperm.xlu0 %2964, %v2458
    %v2966 = vpop.permute.xlu0 %2965
    %2967 = vset.pattern.permute.xlu0 0
    %2968 = vperm.xlu0 %2967, %v2507
    %v2969 = vpop.permute.xlu0 %2968
    %2970 = vset.pattern.permute.xlu0 0
    %2971 = vperm.xlu0 %2970, %v2556
    %v2972 = vpop.permute.xlu0 %2971
    %2973 = vset.pattern.permute.xlu0 0
    %2974 = vperm.xlu0 %2973, %v2605
    %v2975 = vpop.permute.xlu0 %2974
    %2976 = vset.pattern.permute.xlu0 0
    %2977 = vperm.xlu0 %2976, %v2654
    %v2978 = vpop.permute.xlu0 %2977
    %2979 = vset.pattern.permute.xlu0 0
    %2980 = vperm.xlu0 %2979, %v2703
    %v2981 = vpop.permute.xlu0 %2980
    %2982 = vset.pattern.permute.xlu0 0
    %2983 = vperm.xlu0 %2982, %v2752
    %v2984 = vpop.permute.xlu0 %2983
    %2985 = vset.pattern.permute.xlu0 0
    %2986 = vperm.xlu0 %2985, %v2801
    %v2987 = vpop.permute.xlu0 %2986
    %2988 = vset.pattern.permute.xlu0 0
    %2989 = vperm.xlu0 %2988, %v2850
    %v2990 = vpop.permute.xlu0 %2989
    %2991 = vset.pattern.permute.xlu0 0
    %2992 = vperm.xlu0 %2991, %v2899
    %v2993 = vpop.permute.xlu0 %2992
    %2994 = vset.pattern.permute.xlu0 0
    %2995 = vperm.xlu0 %2994, %v2948
    %v2996 = vpop.permute.xlu0 %2995
    %v2997 = vlaneseq
    %v2998 = vshrl.u32 %v2997, 7
    %v2999 = vsub.s32 %v1445, %v2998
    %v3000 = vrot.slane %v2951, %v2999
    %v3001 = vlaneseq
    %v3002 = vshrl.u32 %v3001, 7
    %v3003 = vsub.s32 %v1450, %v3002
    %v3004 = vrot.slane %v2954, %v3003
    %v3005 = vsel %vm1455, %v3004, %v3000
    %v3006 = vlaneseq
    %v3007 = vshrl.u32 %v3006, 7
    %v3008 = vsub.s32 %v1457, %v3007
    %v3009 = vrot.slane %v2957, %v3008
    %v3010 = vsel %vm1462, %v3009, %v3005
    %v3011 = vlaneseq
    %v3012 = vshrl.u32 %v3011, 7
    %v3013 = vsub.s32 %v1464, %v3012
    %v3014 = vrot.slane %v2960, %v3013
    %v3015 = vsel %vm1469, %v3014, %v3010
    %v3016 = vlaneseq
    %v3017 = vshrl.u32 %v3016, 7
    %v3018 = vsub.s32 %v1471, %v3017
    %v3019 = vrot.slane %v2963, %v3018
    %v3020 = vsel %vm1476, %v3019, %v3015
    %v3021 = vlaneseq
    %v3022 = vshrl.u32 %v3021, 7
    %v3023 = vsub.s32 %v1478, %v3022
    %v3024 = vrot.slane %v2966, %v3023
    %v3025 = vsel %vm1483, %v3024, %v3020
    %v3026 = vlaneseq
    %v3027 = vshrl.u32 %v3026, 7
    %v3028 = vsub.s32 %v1485, %v3027
    %v3029 = vrot.slane %v2969, %v3028
    %v3030 = vsel %vm1490, %v3029, %v3025
    %v3031 = vlaneseq
    %v3032 = vshrl.u32 %v3031, 7
    %v3033 = vsub.s32 %v1492, %v3032
    %v3034 = vrot.slane %v2972, %v3033
    %v3035 = vsel %vm1497, %v3034, %v3030
    %v3036 = vlaneseq
    %v3037 = vshrl.u32 %v3036, 7
    %v3038 = vsub.s32 %v1499, %v3037
    %v3039 = vrot.slane %v2975, %v3038
    %v3040 = vsel %vm1504, %v3039, %v3035
    %v3041 = vlaneseq
    %v3042 = vshrl.u32 %v3041, 7
    %v3043 = vsub.s32 %v1506, %v3042
    %v3044 = vrot.slane %v2978, %v3043
    %v3045 = vsel %vm1511, %v3044, %v3040
    %v3046 = vlaneseq
    %v3047 = vshrl.u32 %v3046, 7
    %v3048 = vsub.s32 %v1513, %v3047
    %v3049 = vrot.slane %v2981, %v3048
    %v3050 = vsel %vm1518, %v3049, %v3045
    %v3051 = vlaneseq
    %v3052 = vshrl.u32 %v3051, 7
    %v3053 = vsub.s32 %v1520, %v3052
    %v3054 = vrot.slane %v2984, %v3053
    %v3055 = vsel %vm1525, %v3054, %v3050
    %v3056 = vlaneseq
    %v3057 = vshrl.u32 %v3056, 7
    %v3058 = vsub.s32 %v1527, %v3057
    %v3059 = vrot.slane %v2987, %v3058
    %v3060 = vsel %vm1532, %v3059, %v3055
    %v3061 = vlaneseq
    %v3062 = vshrl.u32 %v3061, 7
    %v3063 = vsub.s32 %v1534, %v3062
    %v3064 = vrot.slane %v2990, %v3063
    %v3065 = vsel %vm1539, %v3064, %v3060
    %v3066 = vlaneseq
    %v3067 = vshrl.u32 %v3066, 7
    %v3068 = vsub.s32 %v1541, %v3067
    %v3069 = vrot.slane %v2993, %v3068
    %v3070 = vsel %vm1546, %v3069, %v3065
    %v3071 = vlaneseq
    %v3072 = vshrl.u32 %v3071, 7
    %v3073 = vsub.s32 %v1548, %v3072
    %v3074 = vrot.slane %v2996, %v3073
    %v3075 = vsel %vm1553, %v3074, %v3070
    %v3077 = vunpack.c.l.s4 1966171168
    %v3078 = vunpack.c.0.s8 %v3077
    %v3079 = vlaneseq
    %v3080 = vshrl.u32 %v3079, 7
    %v3081 = vsub.s32 %v3078, %v3080
    %v3082 = vrot.slane %v3075, %v3081
    %v3084 = vunpack.c.l.s4 1966171168
    %v3085 = vunpack.c.0.s8 %v3084
    %v3086 = vlaneseq
    %v3087 = vshrl.u32 %v3086, 7
    %v3088 = vsub.s32 %v3085, %v3087
    %v3089 = vrot.slane %v3082, %v3088
    %v3091 = vadd.f32 %v1572, %v3089
    %3092 = vst [vmem:[#allocation3] sm:$0x1] %v3091
    // Predicated region
    $region10: #{tpu_custom_call.1} parent=1 // pred_check
      %p3093 = pneg %p12
    $region11: #{tpu_custom_call.1} parent=1 // pred_check_branch
      %3095 = sbr.rel (%p3093) target = $region13
    $region12: #{tpu_custom_call.1} parent=1 // pred_region
      %v3096 = vld [vmem:[#allocation2] sm:$0x1]
      %v3097 = vld [vmem:[#allocation3] sm:$0x1]
      %v3098 = vmul.f32 %v3096, 0.0625
      %v3099 = vmul.f32 %v3096, %v3098
      %v3100 = vsub.f32 %v3097, %v3099
      %v3101 = vmul.f32 %v3100, 0.06666667
      %v3102 = vmax.f32 %v3101, 0.0
      %v3103 = vrsqrt.pop %v3102
      %v3104 = vmul.f32 %v3102, %v3103
      %vm3105 = vcmp.eq.f32.partialorder %v3102, inf
      %v3106 = vsel %vm3105, %v3102, %v3104
      %vm3107 = vcmp.eq.f32.partialorder %v3102, 0.0
      %v3108 = vand.u32 %v3102, 2147483648
      %v3109 = vsel %vm3107, %v3108, %v3106
      %3110 = vst [vmem:[#allocation6] sm:$0x1] %v3098
      %3111 = vst [vmem:[#allocation4] sm:$0x1] %v3109
    $region13: #{tpu_custom_call.1} parent=1 // pred_fallthru
      _
    // Predicated region
    $region14: #{tpu_custom_call.1} parent=1 // pred_check
      _
    $region15: #{tpu_custom_call.1} parent=1 // pred_check_branch
      %3113 = sbr.rel (0) target = $region17
    $region16: #{tpu_custom_call.1} parent=1 // pred_region
      %s3115 = ssub.s32 16, 16
      %3116 = vsyncadd [#allocation5], %s3115
      %s3118 = sshll.u32 [#allocation4], 4
      %s3119 = int_to_ptr.vmem [resolvable:$true] %s3118
      %3121 = dma.vmem_to_hbm [thread:$0]  %s3119, 16, %s1, [#allocation5]
    $region17: #{tpu_custom_call.1} parent=1 // pred_fallthru
      _
    // Predicated region
    $region18: #{tpu_custom_call.1} parent=1 // pred_check
      _
    $region19: #{tpu_custom_call.1} parent=1 // pred_check_branch
      %3123 = sbr.rel (0) target = $region21
    $region20: #{tpu_custom_call.1} parent=1 // pred_region
      %s3125 = ssub.s32 16, 16
      %3126 = vsyncadd [#allocation7], %s3125
      %s3128 = sshll.u32 [#allocation6], 4
      %s3129 = int_to_ptr.vmem [resolvable:$true] %s3128
      %3131 = dma.vmem_to_hbm [thread:$0]  %s3129, 16, %s2, [#allocation7]
    $region21: #{tpu_custom_call.1} parent=1 // pred_fallthru
      _
    // Predicated region
    $region22: #{tpu_custom_call.1} parent=1 // pred_check
      _
    $region23: #{tpu_custom_call.1} parent=1 // pred_check_branch
      %3133 = sbr.rel (0) target = $region25
    $region24: #{tpu_custom_call.1} parent=1 // pred_region
      %3134 = dma.done [#allocation5], 16
    $region25: #{tpu_custom_call.1} parent=1 // pred_fallthru
      _
    // Predicated region
    $region26: #{tpu_custom_call.1} parent=1 // pred_check
      _
    $region27: #{tpu_custom_call.1} parent=1 // pred_check_branch
      %3136 = sbr.rel (0) target = $region29
    $region28: #{tpu_custom_call.1} parent=1 // pred_region
      %3137 = dma.done [#allocation7], 16
    $region29: #{tpu_custom_call.1} parent=1 // pred_fallthru
      _
    %3138 = vsyncpa [#allocation5], 1
    %3139 = vsyncpa [#allocation7], 1

</llo_original>
